<compile_context>
chip_gen: v6e
topology: v6e:2x2x1
jax: 0.10.0
libtpu: 0.0.40
codegen_flags: <defaults>
</compile_context>

<pallas_src>
import functools

import jax
import jax.numpy as jnp
from jax import lax
from jax.experimental import pallas as pl
from jax.experimental.pallas import tpu as pltpu

LEAKY_SLOPE = 0.01  # nn.LeakyReLU default negative_slope


# ----------------------------- Pallas kernel ------------------------------ #

def _mean_variance_kernel(x_ref, w1_ref, w2_ref, b1_ref, b2_ref, s2_ref,
                          cmask_ref, o_ref, y1_scr, *, K, pad, row, m_acc, j0):
    """Fused two-layer KxK conv + folded-BN bias + activation for one image.

    Shift-and-accumulate convolution on a width-padded, flattened spatial
    layout: for every kernel tap (kh, kw) the needed input window is a
    contiguous lane-slice of the flat image at a static offset, so there is no
    im2col materialisation and no in-kernel reshape.  The M (pixel) axis lives
    on the lane dimension -> lane-dense stores even though Cout is tiny.
    """
    # ---- layer 1: per-tap (2c, Cin) @ (Cin, M) dots, accumulated in f32 ----
    acc1 = None
    for kh in range(K):
        for kw in range(K):
            off = j0 + (kh - pad) * row + (kw - pad)          # static python int
            xs = x_ref[:, pl.ds(off, m_acc)]                  # (Cin, M) bf16
            part = jnp.dot(w1_ref[kh * K + kw], xs,
                           preferred_element_type=jnp.float32)  # (2c, M) f32
            acc1 = part if acc1 is None else acc1 + part
    y1 = acc1 + b1_ref[...]                                   # folded BN bias
    y1 = jnp.where(y1 >= 0, y1, LEAKY_SLOPE * y1)             # both branches: LeakyReLU
    y1 = y1 * cmask_ref[...]                                  # zero width-pad junk columns

    # Stage layer-1 activations into a zero-padded VMEM halo for layer 2.
    # (Zero every step: with a "parallel" grid axis each TensorCore has its own
    #  scratch, so a program_id==0 one-shot init would be unsafe on v7x.)
    y1_scr[...] = jnp.zeros(y1_scr.shape, y1_scr.dtype)
    y1_scr[:, pl.ds(j0, m_acc)] = y1.astype(y1_scr.dtype)

    # ---- layer 2: per-tap block-diagonal (2c, 2c) dots -> both branches ----
    acc2 = None
    for kh in range(K):
        for kw in range(K):
            off = j0 + (kh - pad) * row + (kw - pad)
            ys = y1_scr[:, pl.ds(off, m_acc)]                 # (2c, M) bf16
            part = jnp.dot(w2_ref[kh * K + kw], ys,
                           preferred_element_type=jnp.float32)
            acc2 = part if acc2 is None else acc2 + part
    y2 = acc2 + b2_ref[...]
    y2 = jnp.where(y2 >= 0, y2, s2_ref[...] * y2)             # mean: ReLU, var: LeakyReLU
    o_ref[...] = y2.astype(o_ref.dtype)


# ------------------------------- JAX glue ---------------------------------- #

def _flatten_pad_input(x_nchw, pad):
    """(B, C, H, W) f32 -> (B, C, Mflat) bf16 zero-padded flat spatial layout.

    Row stride becomes W+pad (extra zero columns on the right), plus `pad` zero
    rows top/bottom and `pad` zeros at each flat end, so every KxK tap of a
    same-size stride-1 conv is a contiguous in-bounds slice."""
    B, C, H, W = x_nchw.shape
    row = W + pad
    xb = x_nchw.astype(jnp.bfloat16)
    xp = jnp.pad(xb, ((0, 0), (0, 0), (pad, pad), (0, pad)))
    xf = xp.reshape(B, C, (H + 2 * pad) * row)
    return jnp.pad(xf, ((0, 0), (0, 0), (pad, pad)))


def _fold_bn(gamma, beta, running_mean, running_var, eps=1e-5):
    scale = gamma / jnp.sqrt(running_var + eps)
    bias = beta - running_mean * scale
    return scale, bias


def _prepare_layer1(params):
    """Concat mean/var layer-1 weights along Cout; fold BN scale into weights.
    Returns per-tap weights (K*K, 2c, Cin) bf16 and bias (2c, 1) f32."""
    wm = params["w_mean"] * params["bn_mean_scale"]           # (K,K,Cin,c)
    wv = params["w_var"] * params["bn_var_scale"]
    w = jnp.concatenate([wm, wv], axis=-1)                    # (K,K,Cin,2c)
    K, _, Cin, C2 = w.shape
    w1 = jnp.transpose(w, (0, 1, 3, 2)).reshape(K * K, C2, Cin).astype(jnp.bfloat16)
    b1 = jnp.concatenate(
        [params["bn_mean_bias"], params["bn_var_bias"]]).reshape(C2, 1).astype(jnp.float32)
    return w1, b1


def _prepare_layer2(params, out_channel):
    """Per-tap block-diagonal layer-2 weights so both branches run in one dot.
    Returns (K*K, 2c, 2c) bf16 weights, (2c,1) bias, (2c,1) activation slope."""
    c = out_channel
    wm = params["w_mean1"] * params["bn_mean1_scale"]         # (K,K,c,c)
    wv = params["w_var1"] * params["bn_var1_scale"]
    K = wm.shape[0]
    z = jnp.zeros_like(wm)
    top = jnp.concatenate([wm, z], axis=-1)                   # mean in-ch -> [mean out | 0]
    bot = jnp.concatenate([z, wv], axis=-1)                   # var  in-ch -> [0 | var out]
    w = jnp.concatenate([top, bot], axis=2)                   # (K,K,2c,2c) [in, out]
    w2 = jnp.transpose(w, (0, 1, 3, 2)).reshape(K * K, 2 * c, 2 * c).astype(jnp.bfloat16)
    b2 = jnp.concatenate(
        [params["bn_mean1_bias"], params["bn_var1_bias"]]).reshape(2 * c, 1).astype(jnp.float32)
    s2 = jnp.concatenate(
        [jnp.zeros((c,), jnp.float32),                        # mean branch: ReLU
         jnp.full((c,), LEAKY_SLOPE, jnp.float32)]).reshape(2 * c, 1)  # var: LeakyReLU
    return w2, b2, s2


def mean_variance_forward(params, seqs, seqL=None, *, stride, padding):
    """seqs: (n, c, s, h, w) float32.  Returns (mean, variance), each
    (n, out_channel, s, h', w')."""
    del seqL  # unused, as in the PyTorch forward
    n, c, s, h, w = seqs.shape
    K = params["w_mean"].shape[0]
    out_channel = params["w_mean"].shape[-1]
    # TODO(synk): the in-kernel shift-and-accumulate path assumes stride=1
    # "same" convolutions (the GaitGL config); other stride/padding values
    # would need an im2col fallback.
    assert stride == 1 and K % 2 == 1 and padding == K // 2

    B = n * s
    pad = padding
    row = w + pad                       # flattened row stride (extra zero cols)
    m_acc = h * row                     # flattened output length (incl. junk cols)
    j0 = pad + pad * row                # flat offset of pixel (0, 0)
    m_flat = (h + 2 * pad) * row + 2 * pad
    C2 = 2 * out_channel

    # trans(): (n, c, s, h, w) -> (n*s, c, h, w)
    x = jnp.transpose(seqs, (0, 2, 1, 3, 4)).reshape(B, c, h, w)
    x_flat = _flatten_pad_input(x, pad)                       # (B, c, Mflat) bf16

    w1, b1 = _prepare_layer1(params)
    w2, b2, s2 = _prepare_layer2(params, out_channel)
    # Mask that zeroes the `pad` junk columns per flattened row of layer-1's
    # output (they land exactly on layer-2's zero-pad columns in the scratch).
    cmask = ((jnp.arange(m_acc) % row) < w).astype(jnp.float32).reshape(1, m_acc)

    kernel = functools.partial(_mean_variance_kernel, K=K, pad=pad, row=row,
                               m_acc=m_acc, j0=j0)
    out = pl.pallas_call(
        kernel,
        out_shape=jax.ShapeDtypeStruct((B, C2, m_acc), jnp.float32),
        grid_spec=pltpu.PrefetchScalarGridSpec(
            num_scalar_prefetch=0,
            grid=(B,),                                        # one image per step
            in_specs=[
                pl.BlockSpec((None, c, m_flat), lambda b: (b, 0, 0)),   # flat image
                pl.BlockSpec((K * K, C2, c), lambda b: (0, 0, 0)),      # layer-1 taps
                pl.BlockSpec((K * K, C2, C2), lambda b: (0, 0, 0)),     # layer-2 taps
                pl.BlockSpec((C2, 1), lambda b: (0, 0)),                # bias 1
                pl.BlockSpec((C2, 1), lambda b: (0, 0)),                # bias 2
                pl.BlockSpec((C2, 1), lambda b: (0, 0)),                # slope 2
                pl.BlockSpec((1, m_acc), lambda b: (0, 0)),             # column mask
            ],
            out_specs=pl.BlockSpec((None, C2, m_acc), lambda b: (b, 0, 0)),
            scratch_shapes=[pltpu.VMEM((C2, m_flat), jnp.bfloat16)],    # y1 halo
        ),
        compiler_params=pltpu.CompilerParams(
            dimension_semantics=("parallel",)),
    )(x_flat, w1, w2, b1, b2, s2, cmask)

    # Drop the width-pad junk columns, then trans_out():
    # (n*s, 2c, h, w) -> (n, s, 2c, h, w) -> (n, 2c, s, h, w)
    y = out.reshape(n, s, C2, h, row)[..., :w]
    y = jnp.transpose(y, (0, 2, 1, 3, 4))
    return y[:, :out_channel], y[:, out_channel:]


# ------------------------- pure-JAX reference ------------------------------ #
# Mirrors the exact quantization of the kernel path (BN scale folded into the
# weight *before* the bf16 cast, bf16 inputs, f32 accumulation) so the check
# is tight while the semantics match the PyTorch module.

def _ref_conv_bn_act(x_bf16, w_f32, scale, bias, slope, *, stride, padding):
    wq = (w_f32 * scale).astype(jnp.bfloat16)
    y = lax.conv_general_dilated(
        x_bf16, wq, window_strides=(stride, stride),
        padding=[(padding, padding), (padding, padding)],
        dimension_numbers=("NCHW", "HWIO", "NCHW"),
        preferred_element_type=jnp.float32)
    y = y + bias.reshape(1, -1, 1, 1)
    return jnp.where(y >= 0, y, slope * y)


def mean_variance_reference(params, seqs, *, stride, padding):
    n, c, s, h, w = seqs.shape
    x = jnp.transpose(seqs, (0, 2, 1, 3, 4)).reshape(n * s, c, h, w).astype(jnp.bfloat16)

    def branch(w0, sc0, b0, sl0, w1, sc1, b1, sl1):
        y = _ref_conv_bn_act(x, w0, sc0, b0, sl0, stride=stride, padding=padding)
        y = _ref_conv_bn_act(y.astype(jnp.bfloat16), w1, sc1, b1, sl1,
                             stride=stride, padding=padding)
        return y

    m = branch(params["w_mean"], params["bn_mean_scale"], params["bn_mean_bias"],
               LEAKY_SLOPE,
               params["w_mean1"], params["bn_mean1_scale"], params["bn_mean1_bias"],
               0.0)
    v = branch(params["w_var"], params["bn_var_scale"], params["bn_var_bias"],
               LEAKY_SLOPE,
               params["w_var1"], params["bn_var1_scale"], params["bn_var1_bias"],
               LEAKY_SLOPE)

    def _trans_out(y):
        _, co, ho, wo = y.shape
        return jnp.transpose(y.reshape(n, s, co, ho, wo), (0, 2, 1, 3, 4))

    return _trans_out(m), _trans_out(v)


# --------------------------------- main ------------------------------------ #

def _make_params(key, in_channel, out_channel, K):
    ks = jax.random.split(key, 20)

    def conv_w(k, cin, cout):
        return jax.random.normal(k, (K, K, cin, cout), jnp.float32) * 0.1

    def bn(k0, k1, k2, k3, cout):
        gamma = jax.random.uniform(k0, (cout,), jnp.float32, 0.5, 1.5)
        beta = jax.random.normal(k1, (cout,), jnp.float32) * 0.1
        rmean = jax.random.normal(k2, (cout,), jnp.float32) * 0.1
        rvar = jax.random.uniform(k3, (cout,), jnp.float32, 0.5, 1.5)
        return _fold_bn(gamma, beta, rmean, rvar)

    bn_m_s, bn_m_b = bn(ks[4], ks[5], ks[6], ks[7], out_channel)
    bn_m1_s, bn_m1_b = bn(ks[8], ks[9], ks[10], ks[11], out_channel)
    bn_v_s, bn_v_b = bn(ks[12], ks[13], ks[14], ks[15], out_channel)
    bn_v1_s, bn_v1_b = bn(ks[16], ks[17], ks[18], ks[19], out_channel)

    return {
        "w_mean": conv_w(ks[0], in_channel, out_channel),
        "w_mean1": conv_w(ks[1], out_channel, out_channel),
        "w_var": conv_w(ks[2], in_channel, out_channel),
        "w_var1": conv_w(ks[3], out_channel, out_channel),
        "bn_mean_scale": bn_m_s, "bn_mean_bias": bn_m_b,
        "bn_mean1_scale": bn_m1_s, "bn_mean1_bias": bn_m1_b,
        "bn_var_scale": bn_v_s, "bn_var_bias": bn_v_b,
        "bn_var1_scale": bn_v1_s, "bn_var1_bias": bn_v1_b,
    }


if __name__ == "__main__":
    # cfg "MV-8" -> out_channel = 8 ; s=8 so the grid has n*s = 16 steps
    # (>= 8, so both v7x TensorCores get a pipelined stream of >= 4 steps).
    n, c, s, h, w = 2, 4, 8, 16, 16
    out_channel, K, stride, padding = 8, 3, 1, 1

    key = jax.random.PRNGKey(0)
    k_x, k_p = jax.random.split(key)
    seqs = jax.random.normal(k_x, (n, c, s, h, w), jnp.float32)
    params = _make_params(k_p, c, out_channel, K)

    # stride / padding are static Python ints (bound outside the traced args).
    fwd = jax.jit(functools.partial(mean_variance_forward,
                                    stride=stride, padding=padding))
    mean_out, var_out = fwd(params, seqs, None)
    jax.block_until_ready((mean_out, var_out))

    # sanity check against a quantization-matched pure-JAX reference
    mean_ref, var_ref = mean_variance_reference(params, seqs,
                                                stride=stride, padding=padding)
    assert mean_out.shape == (n, out_channel, s, h, w), mean_out.shape
    assert var_out.shape == (n, out_channel, s, h, w), var_out.shape
    assert jnp.allclose(mean_out, mean_ref, atol=1e-3, rtol=1e-3)
    assert jnp.allclose(var_out, var_ref, atol=1e-3, rtol=1e-3)

    print("KERNEL_OK")
</pallas_src>

<mosaic_0001>
module attributes {stable_mosaic.version = 11 : i64} {
  func.func @_mean_variance_kernel(%arg0: i32, %arg1: memref<1x4x308xbf16, #tpu.memory_space<vmem>>, %arg2: memref<9x16x4xbf16, #tpu.memory_space<vmem>>, %arg3: memref<9x16x16xbf16, #tpu.memory_space<vmem>>, %arg4: memref<16x1xf32, #tpu.memory_space<vmem>>, %arg5: memref<16x1xf32, #tpu.memory_space<vmem>>, %arg6: memref<16x1xf32, #tpu.memory_space<vmem>>, %arg7: memref<1x272xf32, #tpu.memory_space<vmem>>, %arg8: memref<1x16x272xf32, #tpu.memory_space<vmem>>, %arg9: memref<16x308xbf16, #tpu.memory_space<vmem>>) attributes {dimension_semantics = [#tpu.dimension_semantics<parallel>], iteration_bounds = array<i64: 16>, scalar_prefetch = 0 : i64, scratch_operands = 1 : i64, tpu.core_type = #tpu.core_type<tc>, window_params = [{transform_indices = @transform_0, window_bounds = array<i64: 1, 4, 308>}, {pipeline_mode = #tpu.pipeline_mode<synchronous>, transform_indices = @transform_1, window_bounds = array<i64: 9, 16, 4>}, {pipeline_mode = #tpu.pipeline_mode<synchronous>, transform_indices = @transform_2, window_bounds = array<i64: 9, 16, 16>}, {pipeline_mode = #tpu.pipeline_mode<synchronous>, transform_indices = @transform_3, window_bounds = array<i64: 16, 1>}, {pipeline_mode = #tpu.pipeline_mode<synchronous>, transform_indices = @transform_4, window_bounds = array<i64: 16, 1>}, {pipeline_mode = #tpu.pipeline_mode<synchronous>, transform_indices = @transform_5, window_bounds = array<i64: 16, 1>}, {pipeline_mode = #tpu.pipeline_mode<synchronous>, transform_indices = @transform_6, window_bounds = array<i64: 1, 272>}, {transform_indices = @transform_7, window_bounds = array<i64: 1, 16, 272>}]} {
    %c0 = arith.constant 0 : index
    %c0_0 = arith.constant 0 : index
    %c0_1 = arith.constant 0 : index
    %0 = vector.load %arg1[%c0, %c0_0, %c0_1] : memref<1x4x308xbf16, #tpu.memory_space<vmem>>, vector<1x4x272xbf16>
    %1 = vector.shape_cast %0 : vector<1x4x272xbf16> to vector<4x272xbf16>
    %c0_2 = arith.constant 0 : index
    %c0_3 = arith.constant 0 : index
    %c0_4 = arith.constant 0 : index
    %2 = vector.load %arg2[%c0_2, %c0_3, %c0_4] : memref<9x16x4xbf16, #tpu.memory_space<vmem>>, vector<1x16x4xbf16>
    %3 = vector.shape_cast %2 : vector<1x16x4xbf16> to vector<16x4xbf16>
    %cst = arith.constant dense<0.000000e+00> : vector<16x272xf32>
    %4 = tpu.matmul %3, %1, %cst {dimension_numbers = #tpu.dot_dimension_numbers<[1], [0], [0], [1], [0, 0, 1, 1], [], []>} : vector<16x4xbf16>, vector<4x272xbf16>, vector<16x272xf32> -> vector<16x272xf32>
    %c0_5 = arith.constant 0 : index
    %c0_6 = arith.constant 0 : index
    %c1 = arith.constant 1 : index
    %5 = vector.load %arg1[%c0_5, %c0_6, %c1] : memref<1x4x308xbf16, #tpu.memory_space<vmem>>, vector<1x4x272xbf16>
    %6 = vector.shape_cast %5 : vector<1x4x272xbf16> to vector<4x272xbf16>
    %c1_7 = arith.constant 1 : index
    %c0_8 = arith.constant 0 : index
    %c0_9 = arith.constant 0 : index
    %7 = vector.load %arg2[%c1_7, %c0_8, %c0_9] : memref<9x16x4xbf16, #tpu.memory_space<vmem>>, vector<1x16x4xbf16>
    %8 = vector.shape_cast %7 : vector<1x16x4xbf16> to vector<16x4xbf16>
    %cst_10 = arith.constant dense<0.000000e+00> : vector<16x272xf32>
    %9 = tpu.matmul %8, %6, %cst_10 {dimension_numbers = #tpu.dot_dimension_numbers<[1], [0], [0], [1], [0, 0, 1, 1], [], []>} : vector<16x4xbf16>, vector<4x272xbf16>, vector<16x272xf32> -> vector<16x272xf32>
    %10 = arith.addf %4, %9 : vector<16x272xf32>
    %c0_11 = arith.constant 0 : index
    %c0_12 = arith.constant 0 : index
    %c2 = arith.constant 2 : index
    %11 = vector.load %arg1[%c0_11, %c0_12, %c2] : memref<1x4x308xbf16, #tpu.memory_space<vmem>>, vector<1x4x272xbf16>
    %12 = vector.shape_cast %11 : vector<1x4x272xbf16> to vector<4x272xbf16>
    %c2_13 = arith.constant 2 : index
    %c0_14 = arith.constant 0 : index
    %c0_15 = arith.constant 0 : index
    %13 = vector.load %arg2[%c2_13, %c0_14, %c0_15] : memref<9x16x4xbf16, #tpu.memory_space<vmem>>, vector<1x16x4xbf16>
    %14 = vector.shape_cast %13 : vector<1x16x4xbf16> to vector<16x4xbf16>
    %cst_16 = arith.constant dense<0.000000e+00> : vector<16x272xf32>
    %15 = tpu.matmul %14, %12, %cst_16 {dimension_numbers = #tpu.dot_dimension_numbers<[1], [0], [0], [1], [0, 0, 1, 1], [], []>} : vector<16x4xbf16>, vector<4x272xbf16>, vector<16x272xf32> -> vector<16x272xf32>
    %16 = arith.addf %10, %15 : vector<16x272xf32>
    %c0_17 = arith.constant 0 : index
    %c0_18 = arith.constant 0 : index
    %c17 = arith.constant 17 : index
    %17 = vector.load %arg1[%c0_17, %c0_18, %c17] : memref<1x4x308xbf16, #tpu.memory_space<vmem>>, vector<1x4x272xbf16>
    %18 = vector.shape_cast %17 : vector<1x4x272xbf16> to vector<4x272xbf16>
    %c3 = arith.constant 3 : index
    %c0_19 = arith.constant 0 : index
    %c0_20 = arith.constant 0 : index
    %19 = vector.load %arg2[%c3, %c0_19, %c0_20] : memref<9x16x4xbf16, #tpu.memory_space<vmem>>, vector<1x16x4xbf16>
    %20 = vector.shape_cast %19 : vector<1x16x4xbf16> to vector<16x4xbf16>
    %cst_21 = arith.constant dense<0.000000e+00> : vector<16x272xf32>
    %21 = tpu.matmul %20, %18, %cst_21 {dimension_numbers = #tpu.dot_dimension_numbers<[1], [0], [0], [1], [0, 0, 1, 1], [], []>} : vector<16x4xbf16>, vector<4x272xbf16>, vector<16x272xf32> -> vector<16x272xf32>
    %22 = arith.addf %16, %21 : vector<16x272xf32>
    %c0_22 = arith.constant 0 : index
    %c0_23 = arith.constant 0 : index
    %c18 = arith.constant 18 : index
    %23 = vector.load %arg1[%c0_22, %c0_23, %c18] : memref<1x4x308xbf16, #tpu.memory_space<vmem>>, vector<1x4x272xbf16>
    %24 = vector.shape_cast %23 : vector<1x4x272xbf16> to vector<4x272xbf16>
    %c4 = arith.constant 4 : index
    %c0_24 = arith.constant 0 : index
    %c0_25 = arith.constant 0 : index
    %25 = vector.load %arg2[%c4, %c0_24, %c0_25] : memref<9x16x4xbf16, #tpu.memory_space<vmem>>, vector<1x16x4xbf16>
    %26 = vector.shape_cast %25 : vector<1x16x4xbf16> to vector<16x4xbf16>
    %cst_26 = arith.constant dense<0.000000e+00> : vector<16x272xf32>
    %27 = tpu.matmul %26, %24, %cst_26 {dimension_numbers = #tpu.dot_dimension_numbers<[1], [0], [0], [1], [0, 0, 1, 1], [], []>} : vector<16x4xbf16>, vector<4x272xbf16>, vector<16x272xf32> -> vector<16x272xf32>
    %28 = arith.addf %22, %27 : vector<16x272xf32>
    %c0_27 = arith.constant 0 : index
    %c0_28 = arith.constant 0 : index
    %c19 = arith.constant 19 : index
    %29 = vector.load %arg1[%c0_27, %c0_28, %c19] : memref<1x4x308xbf16, #tpu.memory_space<vmem>>, vector<1x4x272xbf16>
    %30 = vector.shape_cast %29 : vector<1x4x272xbf16> to vector<4x272xbf16>
    %c5 = arith.constant 5 : index
    %c0_29 = arith.constant 0 : index
    %c0_30 = arith.constant 0 : index
    %31 = vector.load %arg2[%c5, %c0_29, %c0_30] : memref<9x16x4xbf16, #tpu.memory_space<vmem>>, vector<1x16x4xbf16>
    %32 = vector.shape_cast %31 : vector<1x16x4xbf16> to vector<16x4xbf16>
    %cst_31 = arith.constant dense<0.000000e+00> : vector<16x272xf32>
    %33 = tpu.matmul %32, %30, %cst_31 {dimension_numbers = #tpu.dot_dimension_numbers<[1], [0], [0], [1], [0, 0, 1, 1], [], []>} : vector<16x4xbf16>, vector<4x272xbf16>, vector<16x272xf32> -> vector<16x272xf32>
    %34 = arith.addf %28, %33 : vector<16x272xf32>
    %c0_32 = arith.constant 0 : index
    %c0_33 = arith.constant 0 : index
    %c34 = arith.constant 34 : index
    %35 = vector.load %arg1[%c0_32, %c0_33, %c34] : memref<1x4x308xbf16, #tpu.memory_space<vmem>>, vector<1x4x272xbf16>
    %36 = vector.shape_cast %35 : vector<1x4x272xbf16> to vector<4x272xbf16>
    %c6 = arith.constant 6 : index
    %c0_34 = arith.constant 0 : index
    %c0_35 = arith.constant 0 : index
    %37 = vector.load %arg2[%c6, %c0_34, %c0_35] : memref<9x16x4xbf16, #tpu.memory_space<vmem>>, vector<1x16x4xbf16>
    %38 = vector.shape_cast %37 : vector<1x16x4xbf16> to vector<16x4xbf16>
    %cst_36 = arith.constant dense<0.000000e+00> : vector<16x272xf32>
    %39 = tpu.matmul %38, %36, %cst_36 {dimension_numbers = #tpu.dot_dimension_numbers<[1], [0], [0], [1], [0, 0, 1, 1], [], []>} : vector<16x4xbf16>, vector<4x272xbf16>, vector<16x272xf32> -> vector<16x272xf32>
    %40 = arith.addf %34, %39 : vector<16x272xf32>
    %c0_37 = arith.constant 0 : index
    %c0_38 = arith.constant 0 : index
    %c35 = arith.constant 35 : index
    %41 = vector.load %arg1[%c0_37, %c0_38, %c35] : memref<1x4x308xbf16, #tpu.memory_space<vmem>>, vector<1x4x272xbf16>
    %42 = vector.shape_cast %41 : vector<1x4x272xbf16> to vector<4x272xbf16>
    %c7 = arith.constant 7 : index
    %c0_39 = arith.constant 0 : index
    %c0_40 = arith.constant 0 : index
    %43 = vector.load %arg2[%c7, %c0_39, %c0_40] : memref<9x16x4xbf16, #tpu.memory_space<vmem>>, vector<1x16x4xbf16>
    %44 = vector.shape_cast %43 : vector<1x16x4xbf16> to vector<16x4xbf16>
    %cst_41 = arith.constant dense<0.000000e+00> : vector<16x272xf32>
    %45 = tpu.matmul %44, %42, %cst_41 {dimension_numbers = #tpu.dot_dimension_numbers<[1], [0], [0], [1], [0, 0, 1, 1], [], []>} : vector<16x4xbf16>, vector<4x272xbf16>, vector<16x272xf32> -> vector<16x272xf32>
    %46 = arith.addf %40, %45 : vector<16x272xf32>
    %c0_42 = arith.constant 0 : index
    %c0_43 = arith.constant 0 : index
    %c36 = arith.constant 36 : index
    %47 = vector.load %arg1[%c0_42, %c0_43, %c36] : memref<1x4x308xbf16, #tpu.memory_space<vmem>>, vector<1x4x272xbf16>
    %48 = vector.shape_cast %47 : vector<1x4x272xbf16> to vector<4x272xbf16>
    %c8 = arith.constant 8 : index
    %c0_44 = arith.constant 0 : index
    %c0_45 = arith.constant 0 : index
    %49 = vector.load %arg2[%c8, %c0_44, %c0_45] : memref<9x16x4xbf16, #tpu.memory_space<vmem>>, vector<1x16x4xbf16>
    %50 = vector.shape_cast %49 : vector<1x16x4xbf16> to vector<16x4xbf16>
    %cst_46 = arith.constant dense<0.000000e+00> : vector<16x272xf32>
    %51 = tpu.matmul %50, %48, %cst_46 {dimension_numbers = #tpu.dot_dimension_numbers<[1], [0], [0], [1], [0, 0, 1, 1], [], []>} : vector<16x4xbf16>, vector<4x272xbf16>, vector<16x272xf32> -> vector<16x272xf32>
    %52 = arith.addf %46, %51 : vector<16x272xf32>
    %c0_47 = arith.constant 0 : index
    %c0_48 = arith.constant 0 : index
    %53 = vector.load %arg4[%c0_47, %c0_48] : memref<16x1xf32, #tpu.memory_space<vmem>>, vector<16x1xf32>
    %54 = vector.broadcast %53 : vector<16x1xf32> to vector<16x272xf32>
    %55 = arith.addf %52, %54 : vector<16x272xf32>
    %cst_49 = arith.constant 0.000000e+00 : f32
    %56 = vector.broadcast %cst_49 : f32 to vector<16x272xf32>
    %57 = arith.cmpf oge, %55, %56 : vector<16x272xf32>
    %cst_50 = arith.constant 0.00999999977 : f32
    %58 = vector.broadcast %cst_50 : f32 to vector<16x272xf32>
    %59 = arith.mulf %58, %55 : vector<16x272xf32>
    %60 = arith.select %57, %55, %59 : vector<16x272xi1>, vector<16x272xf32>
    %c0_51 = arith.constant 0 : index
    %c0_52 = arith.constant 0 : index
    %61 = vector.load %arg7[%c0_51, %c0_52] : memref<1x272xf32, #tpu.memory_space<vmem>>, vector<1x272xf32>
    %62 = vector.broadcast %61 : vector<1x272xf32> to vector<16x272xf32>
    %63 = arith.mulf %60, %62 : vector<16x272xf32>
    %cst_53 = arith.constant 0.000000e+00 : bf16
    %64 = vector.broadcast %cst_53 : bf16 to vector<16x308xbf16>
    %c0_54 = arith.constant 0 : index
    %c0_55 = arith.constant 0 : index
    %65 = vector.load %arg9[%c0_54, %c0_55] : memref<16x308xbf16, #tpu.memory_space<vmem>>, vector<16x308xbf16>
    tpu.vector_store %arg9[%c0_54, %c0_55], %64 {strides = array<i32>} : memref<16x308xbf16, #tpu.memory_space<vmem>>, vector<16x308xbf16>,
    %66 = arith.truncf %63 : vector<16x272xf32> to vector<16x272xbf16>
    %c0_56 = arith.constant 0 : index
    %c18_57 = arith.constant 18 : index
    %67 = vector.load %arg9[%c0_56, %c18_57] : memref<16x308xbf16, #tpu.memory_space<vmem>>, vector<16x272xbf16>
    tpu.vector_store %arg9[%c0_56, %c18_57], %66 {strides = array<i32>} : memref<16x308xbf16, #tpu.memory_space<vmem>>, vector<16x272xbf16>,
    %c0_58 = arith.constant 0 : index
    %c0_59 = arith.constant 0 : index
    %68 = vector.load %arg9[%c0_58, %c0_59] : memref<16x308xbf16, #tpu.memory_space<vmem>>, vector<16x272xbf16>
    %c0_60 = arith.constant 0 : index
    %c0_61 = arith.constant 0 : index
    %c0_62 = arith.constant 0 : index
    %69 = vector.load %arg3[%c0_60, %c0_61, %c0_62] : memref<9x16x16xbf16, #tpu.memory_space<vmem>>, vector<1x16x16xbf16>
    %70 = vector.shape_cast %69 : vector<1x16x16xbf16> to vector<16x16xbf16>
    %cst_63 = arith.constant dense<0.000000e+00> : vector<16x272xf32>
    %71 = tpu.matmul %70, %68, %cst_63 {dimension_numbers = #tpu.dot_dimension_numbers<[1], [0], [0], [1], [0, 0, 1, 1], [], []>} : vector<16x16xbf16>, vector<16x272xbf16>, vector<16x272xf32> -> vector<16x272xf32>
    %c0_64 = arith.constant 0 : index
    %c1_65 = arith.constant 1 : index
    %72 = vector.load %arg9[%c0_64, %c1_65] : memref<16x308xbf16, #tpu.memory_space<vmem>>, vector<16x272xbf16>
    %c1_66 = arith.constant 1 : index
    %c0_67 = arith.constant 0 : index
    %c0_68 = arith.constant 0 : index
    %73 = vector.load %arg3[%c1_66, %c0_67, %c0_68] : memref<9x16x16xbf16, #tpu.memory_space<vmem>>, vector<1x16x16xbf16>
    %74 = vector.shape_cast %73 : vector<1x16x16xbf16> to vector<16x16xbf16>
    %cst_69 = arith.constant dense<0.000000e+00> : vector<16x272xf32>
    %75 = tpu.matmul %74, %72, %cst_69 {dimension_numbers = #tpu.dot_dimension_numbers<[1], [0], [0], [1], [0, 0, 1, 1], [], []>} : vector<16x16xbf16>, vector<16x272xbf16>, vector<16x272xf32> -> vector<16x272xf32>
    %76 = arith.addf %71, %75 : vector<16x272xf32>
    %c0_70 = arith.constant 0 : index
    %c2_71 = arith.constant 2 : index
    %77 = vector.load %arg9[%c0_70, %c2_71] : memref<16x308xbf16, #tpu.memory_space<vmem>>, vector<16x272xbf16>
    %c2_72 = arith.constant 2 : index
    %c0_73 = arith.constant 0 : index
    %c0_74 = arith.constant 0 : index
    %78 = vector.load %arg3[%c2_72, %c0_73, %c0_74] : memref<9x16x16xbf16, #tpu.memory_space<vmem>>, vector<1x16x16xbf16>
    %79 = vector.shape_cast %78 : vector<1x16x16xbf16> to vector<16x16xbf16>
    %cst_75 = arith.constant dense<0.000000e+00> : vector<16x272xf32>
    %80 = tpu.matmul %79, %77, %cst_75 {dimension_numbers = #tpu.dot_dimension_numbers<[1], [0], [0], [1], [0, 0, 1, 1], [], []>} : vector<16x16xbf16>, vector<16x272xbf16>, vector<16x272xf32> -> vector<16x272xf32>
    %81 = arith.addf %76, %80 : vector<16x272xf32>
    %c0_76 = arith.constant 0 : index
    %c17_77 = arith.constant 17 : index
    %82 = vector.load %arg9[%c0_76, %c17_77] : memref<16x308xbf16, #tpu.memory_space<vmem>>, vector<16x272xbf16>
    %c3_78 = arith.constant 3 : index
    %c0_79 = arith.constant 0 : index
    %c0_80 = arith.constant 0 : index
    %83 = vector.load %arg3[%c3_78, %c0_79, %c0_80] : memref<9x16x16xbf16, #tpu.memory_space<vmem>>, vector<1x16x16xbf16>
    %84 = vector.shape_cast %83 : vector<1x16x16xbf16> to vector<16x16xbf16>
    %cst_81 = arith.constant dense<0.000000e+00> : vector<16x272xf32>
    %85 = tpu.matmul %84, %82, %cst_81 {dimension_numbers = #tpu.dot_dimension_numbers<[1], [0], [0], [1], [0, 0, 1, 1], [], []>} : vector<16x16xbf16>, vector<16x272xbf16>, vector<16x272xf32> -> vector<16x272xf32>
    %86 = arith.addf %81, %85 : vector<16x272xf32>
    %c0_82 = arith.constant 0 : index
    %c18_83 = arith.constant 18 : index
    %87 = vector.load %arg9[%c0_82, %c18_83] : memref<16x308xbf16, #tpu.memory_space<vmem>>, vector<16x272xbf16>
    %c4_84 = arith.constant 4 : index
    %c0_85 = arith.constant 0 : index
    %c0_86 = arith.constant 0 : index
    %88 = vector.load %arg3[%c4_84, %c0_85, %c0_86] : memref<9x16x16xbf16, #tpu.memory_space<vmem>>, vector<1x16x16xbf16>
    %89 = vector.shape_cast %88 : vector<1x16x16xbf16> to vector<16x16xbf16>
    %cst_87 = arith.constant dense<0.000000e+00> : vector<16x272xf32>
    %90 = tpu.matmul %89, %87, %cst_87 {dimension_numbers = #tpu.dot_dimension_numbers<[1], [0], [0], [1], [0, 0, 1, 1], [], []>} : vector<16x16xbf16>, vector<16x272xbf16>, vector<16x272xf32> -> vector<16x272xf32>
    %91 = arith.addf %86, %90 : vector<16x272xf32>
    %c0_88 = arith.constant 0 : index
    %c19_89 = arith.constant 19 : index
    %92 = vector.load %arg9[%c0_88, %c19_89] : memref<16x308xbf16, #tpu.memory_space<vmem>>, vector<16x272xbf16>
    %c5_90 = arith.constant 5 : index
    %c0_91 = arith.constant 0 : index
    %c0_92 = arith.constant 0 : index
    %93 = vector.load %arg3[%c5_90, %c0_91, %c0_92] : memref<9x16x16xbf16, #tpu.memory_space<vmem>>, vector<1x16x16xbf16>
    %94 = vector.shape_cast %93 : vector<1x16x16xbf16> to vector<16x16xbf16>
    %cst_93 = arith.constant dense<0.000000e+00> : vector<16x272xf32>
    %95 = tpu.matmul %94, %92, %cst_93 {dimension_numbers = #tpu.dot_dimension_numbers<[1], [0], [0], [1], [0, 0, 1, 1], [], []>} : vector<16x16xbf16>, vector<16x272xbf16>, vector<16x272xf32> -> vector<16x272xf32>
    %96 = arith.addf %91, %95 : vector<16x272xf32>
    %c0_94 = arith.constant 0 : index
    %c34_95 = arith.constant 34 : index
    %97 = vector.load %arg9[%c0_94, %c34_95] : memref<16x308xbf16, #tpu.memory_space<vmem>>, vector<16x272xbf16>
    %c6_96 = arith.constant 6 : index
    %c0_97 = arith.constant 0 : index
    %c0_98 = arith.constant 0 : index
    %98 = vector.load %arg3[%c6_96, %c0_97, %c0_98] : memref<9x16x16xbf16, #tpu.memory_space<vmem>>, vector<1x16x16xbf16>
    %99 = vector.shape_cast %98 : vector<1x16x16xbf16> to vector<16x16xbf16>
    %cst_99 = arith.constant dense<0.000000e+00> : vector<16x272xf32>
    %100 = tpu.matmul %99, %97, %cst_99 {dimension_numbers = #tpu.dot_dimension_numbers<[1], [0], [0], [1], [0, 0, 1, 1], [], []>} : vector<16x16xbf16>, vector<16x272xbf16>, vector<16x272xf32> -> vector<16x272xf32>
    %101 = arith.addf %96, %100 : vector<16x272xf32>
    %c0_100 = arith.constant 0 : index
    %c35_101 = arith.constant 35 : index
    %102 = vector.load %arg9[%c0_100, %c35_101] : memref<16x308xbf16, #tpu.memory_space<vmem>>, vector<16x272xbf16>
    %c7_102 = arith.constant 7 : index
    %c0_103 = arith.constant 0 : index
    %c0_104 = arith.constant 0 : index
    %103 = vector.load %arg3[%c7_102, %c0_103, %c0_104] : memref<9x16x16xbf16, #tpu.memory_space<vmem>>, vector<1x16x16xbf16>
    %104 = vector.shape_cast %103 : vector<1x16x16xbf16> to vector<16x16xbf16>
    %cst_105 = arith.constant dense<0.000000e+00> : vector<16x272xf32>
    %105 = tpu.matmul %104, %102, %cst_105 {dimension_numbers = #tpu.dot_dimension_numbers<[1], [0], [0], [1], [0, 0, 1, 1], [], []>} : vector<16x16xbf16>, vector<16x272xbf16>, vector<16x272xf32> -> vector<16x272xf32>
    %106 = arith.addf %101, %105 : vector<16x272xf32>
    %c0_106 = arith.constant 0 : index
    %c36_107 = arith.constant 36 : index
    %107 = vector.load %arg9[%c0_106, %c36_107] : memref<16x308xbf16, #tpu.memory_space<vmem>>, vector<16x272xbf16>
    %c8_108 = arith.constant 8 : index
    %c0_109 = arith.constant 0 : index
    %c0_110 = arith.constant 0 : index
    %108 = vector.load %arg3[%c8_108, %c0_109, %c0_110] : memref<9x16x16xbf16, #tpu.memory_space<vmem>>, vector<1x16x16xbf16>
    %109 = vector.shape_cast %108 : vector<1x16x16xbf16> to vector<16x16xbf16>
    %cst_111 = arith.constant dense<0.000000e+00> : vector<16x272xf32>
    %110 = tpu.matmul %109, %107, %cst_111 {dimension_numbers = #tpu.dot_dimension_numbers<[1], [0], [0], [1], [0, 0, 1, 1], [], []>} : vector<16x16xbf16>, vector<16x272xbf16>, vector<16x272xf32> -> vector<16x272xf32>
    %111 = arith.addf %106, %110 : vector<16x272xf32>
    %c0_112 = arith.constant 0 : index
    %c0_113 = arith.constant 0 : index
    %112 = vector.load %arg5[%c0_112, %c0_113] : memref<16x1xf32, #tpu.memory_space<vmem>>, vector<16x1xf32>
    %113 = vector.broadcast %112 : vector<16x1xf32> to vector<16x272xf32>
    %114 = arith.addf %111, %113 : vector<16x272xf32>
    %cst_114 = arith.constant 0.000000e+00 : f32
    %115 = vector.broadcast %cst_114 : f32 to vector<16x272xf32>
    %116 = arith.cmpf oge, %114, %115 : vector<16x272xf32>
    %c0_115 = arith.constant 0 : index
    %c0_116 = arith.constant 0 : index
    %117 = vector.load %arg6[%c0_115, %c0_116] : memref<16x1xf32, #tpu.memory_space<vmem>>, vector<16x1xf32>
    %118 = vector.broadcast %117 : vector<16x1xf32> to vector<16x272xf32>
    %119 = arith.mulf %118, %114 : vector<16x272xf32>
    %120 = arith.select %116, %114, %119 : vector<16x272xi1>, vector<16x272xf32>
    %c0_117 = arith.constant 0 : index
    %c0_118 = arith.constant 0 : index
    %c0_119 = arith.constant 0 : index
    %121 = vector.load %arg8[%c0_117, %c0_118, %c0_119] : memref<1x16x272xf32, #tpu.memory_space<vmem>>, vector<1x16x272xf32>
    %122 = vector.shape_cast %121 : vector<1x16x272xf32> to vector<16x272xf32>
    %123 = vector.shape_cast %120 : vector<16x272xf32> to vector<1x16x272xf32>
    tpu.vector_store %arg8[%c0_117, %c0_118, %c0_119], %123 {strides = array<i32>} : memref<1x16x272xf32, #tpu.memory_space<vmem>>, vector<1x16x272xf32>,
    return
  }
  func.func @transform_0(%arg0: i32) -> (i32, i32, i32) {
    %c0_i32 = arith.constant 0 : i32
    %c0_i32_0 = arith.constant 0 : i32
    %c0_i32_1 = arith.constant 0 : i32
    return %arg0, %c0_i32, %c0_i32_0 : i32, i32, i32
  }
  func.func @transform_1(%arg0: i32) -> (i32, i32, i32) {
    %c0_i32 = arith.constant 0 : i32
    %c0_i32_0 = arith.constant 0 : i32
    %c0_i32_1 = arith.constant 0 : i32
    %c0_i32_2 = arith.constant 0 : i32
    return %c0_i32, %c0_i32_0, %c0_i32_1 : i32, i32, i32
  }
  func.func @transform_2(%arg0: i32) -> (i32, i32, i32) {
    %c0_i32 = arith.constant 0 : i32
    %c0_i32_0 = arith.constant 0 : i32
    %c0_i32_1 = arith.constant 0 : i32
    %c0_i32_2 = arith.constant 0 : i32
    return %c0_i32, %c0_i32_0, %c0_i32_1 : i32, i32, i32
  }
  func.func @transform_3(%arg0: i32) -> (i32, i32) {
    %c0_i32 = arith.constant 0 : i32
    %c0_i32_0 = arith.constant 0 : i32
    %c0_i32_1 = arith.constant 0 : i32
    return %c0_i32, %c0_i32_0 : i32, i32
  }
  func.func @transform_4(%arg0: i32) -> (i32, i32) {
    %c0_i32 = arith.constant 0 : i32
    %c0_i32_0 = arith.constant 0 : i32
    %c0_i32_1 = arith.constant 0 : i32
    return %c0_i32, %c0_i32_0 : i32, i32
  }
  func.func @transform_5(%arg0: i32) -> (i32, i32) {
    %c0_i32 = arith.constant 0 : i32
    %c0_i32_0 = arith.constant 0 : i32
    %c0_i32_1 = arith.constant 0 : i32
    return %c0_i32, %c0_i32_0 : i32, i32
  }
  func.func @transform_6(%arg0: i32) -> (i32, i32) {
    %c0_i32 = arith.constant 0 : i32
    %c0_i32_0 = arith.constant 0 : i32
    %c0_i32_1 = arith.constant 0 : i32
    return %c0_i32, %c0_i32_0 : i32, i32
  }
  func.func @transform_7(%arg0: i32) -> (i32, i32, i32) {
    %c0_i32 = arith.constant 0 : i32
    %c0_i32_0 = arith.constant 0 : i32
    %c0_i32_1 = arith.constant 0 : i32
    return %arg0, %c0_i32, %c0_i32_0 : i32, i32, i32
  }
}

</mosaic_0001>

<llo_original>
// kernel: mean_variance_forward.1
$region0: #{mean_variance_forward.1}
  #allocation0 [shape = 'u32[]', space=smem, size = 0x4, offset = 0x4, fixed_abs, tag = 'smem constant byte address 0x4 - core index']
  #allocation1 [shape = 'u32[144,128]{1,0:T(1,128)}', space=vmem, size = 0x12000, scoped, tag = 'internal scratch']
  #allocation2 [shape = 'bf16[16,308]{1,0:T(8,128)(2,1)}', space=vmem, size = 0x3000, scoped, tag = 'scratch operand']
  %s0 = inlined_call_operand.vmem [shape: bf16[16,4,308], index: 0, kind: input, shape index: {}]
  %s1 = inlined_call_operand.vmem [shape: bf16[9,16,4], index: 1, kind: input, shape index: {}]
  %s2 = inlined_call_operand.vmem [shape: bf16[9,16,16], index: 2, kind: input, shape index: {}]
  %s3 = inlined_call_operand.vmem [shape: f32[16,1], index: 3, kind: input, shape index: {}]
  %s4 = inlined_call_operand.vmem [shape: f32[16,1], index: 4, kind: input, shape index: {}]
  %s5 = inlined_call_operand.vmem [shape: f32[16,1], index: 5, kind: input, shape index: {}]
  %s6 = inlined_call_operand.vmem [shape: f32[1,272], index: 6, kind: input, shape index: {}]
  %s7 = inlined_call_operand.vmem [shape: f32[16,16,272], index: 7, kind: output, shape index: {}]
  %s8 = sld [smem:[#allocation0]]
  $region61: #{mean_variance_forward.1} parent=0
    _
  %s10 = ssub.s32 1, %s8
  %s11 = scalar_select 0, %s10, %s8
  loop: start=0, step=1, limit=18
  $region2: #{mean_variance_forward.1} parent=0 // loop_pre_header
    _
  $region3: #{mean_variance_forward.1} parent=0 // loop_header
    %s13 = sphi 0, %s17
    %p14 = scmp.ge.s32.totalorder %s13, 18
    %s23 = sphi 0, %s25
    %s26 = sphi 0, %s23
    %s27 = sphi 0, %s26
    %s43 = sphi 0, %s27
    %s47 = sphi 0, %s47
    %s49 = sphi 0, %s47
    %s50 = sphi 0, %s49
    %s64 = sphi 0, %s50
    %s68 = sphi 0, %s68
    %s70 = sphi 0, %s68
    %s71 = sphi 0, %s70
    %s85 = sphi 0, %s71
    %s89 = sphi 0, %s89
    %s91 = sphi 0, %s89
    %s92 = sphi 0, %s91
    %s106 = sphi 0, %s92
    %s110 = sphi 0, %s110
    %s112 = sphi 0, %s110
    %s113 = sphi 0, %s112
    %s127 = sphi 0, %s113
    %s131 = sphi 0, %s131
    %s133 = sphi 0, %s131
    %s134 = sphi 0, %s133
    %s148 = sphi 0, %s134
    %s152 = sphi 0, %s152
    %s154 = sphi 0, %s152
    %s155 = sphi 0, %s154
    %s169 = sphi 0, %s155
    %s175 = sphi 0, %s177
    %s178 = sphi 0, %s175
    %s179 = sphi 0, %s178
    %s195 = sphi 0, %s179
  $region4: #{mean_variance_forward.1} parent=0 // loop_header_branch
    %16 = sbr.rel (%p14) target = $region8
  $region5: #{mean_variance_forward.1} parent=0 // loop_body
    %s18 = ssub.s32 %s13, 1
    %s19 = ssub.s32 %s13, 2
    %s20 = sadd.s32 %s13, 1
    %s21 = ssub.s32 %s13, %s20
    %p22 = scmp.eq.s32.totalorder %s21, 0
    %s24 = sadd.s32 %s23, 1
    %s25 = scalar_select %p22, %s23, %s24
    %p28 = pneg %p22
    %p29 = scmp.eq.s32.totalorder %s13, 15
    %p30 = por %p28, %p29
    %p31 = scmp.ne.s32.totalorder %s23, %s26
    %p32 = scmp.eq.s32.totalorder %s13, 0
    %p33 = por %p31, %p32
    %p34 = scmp.ne.s32.totalorder %s23, %s26
    %p35 = scmp.eq.s32.totalorder %s18, 15
    %p36 = por %p34, %p35
    %p37 = scmp.ne.s32.totalorder %s26, %s27
    %p38 = scmp.eq.s32.totalorder %s18, 0
    %p39 = por %p37, %p38
    %p40 = scmp.ne.s32.totalorder %s26, %s27
    %p41 = scmp.eq.s32.totalorder %s19, 15
    %p42 = por %p40, %p41
    %p44 = scmp.ne.s32.totalorder %s27, %s43
    %p45 = scmp.eq.s32.totalorder %s19, 0
    %p46 = por %p44, %p45
    %s48 = sadd.s32 %s47, 1
    %p51 = scmp.eq.s32.totalorder %s13, 15
    %p52 = scmp.ne.s32.totalorder %s47, %s49
    %p53 = scmp.eq.s32.totalorder %s13, 0
    %p54 = por %p52, %p53
    %p55 = scmp.ne.s32.totalorder %s47, %s49
    %p56 = scmp.eq.s32.totalorder %s18, 15
    %p57 = por %p55, %p56
    %p58 = scmp.ne.s32.totalorder %s49, %s50
    %p59 = scmp.eq.s32.totalorder %s18, 0
    %p60 = por %p58, %p59
    %p61 = scmp.ne.s32.totalorder %s49, %s50
    %p62 = scmp.eq.s32.totalorder %s19, 15
    %p63 = por %p61, %p62
    %p65 = scmp.ne.s32.totalorder %s50, %s64
    %p66 = scmp.eq.s32.totalorder %s19, 0
    %p67 = por %p65, %p66
    %s69 = sadd.s32 %s68, 1
    %p72 = scmp.eq.s32.totalorder %s13, 15
    %p73 = scmp.ne.s32.totalorder %s68, %s70
    %p74 = scmp.eq.s32.totalorder %s13, 0
    %p75 = por %p73, %p74
    %p76 = scmp.ne.s32.totalorder %s68, %s70
    %p77 = scmp.eq.s32.totalorder %s18, 15
    %p78 = por %p76, %p77
    %p79 = scmp.ne.s32.totalorder %s70, %s71
    %p80 = scmp.eq.s32.totalorder %s18, 0
    %p81 = por %p79, %p80
    %p82 = scmp.ne.s32.totalorder %s70, %s71
    %p83 = scmp.eq.s32.totalorder %s19, 15
    %p84 = por %p82, %p83
    %p86 = scmp.ne.s32.totalorder %s71, %s85
    %p87 = scmp.eq.s32.totalorder %s19, 0
    %p88 = por %p86, %p87
    %s90 = sadd.s32 %s89, 1
    %p93 = scmp.eq.s32.totalorder %s13, 15
    %p94 = scmp.ne.s32.totalorder %s89, %s91
    %p95 = scmp.eq.s32.totalorder %s13, 0
    %p96 = por %p94, %p95
    %p97 = scmp.ne.s32.totalorder %s89, %s91
    %p98 = scmp.eq.s32.totalorder %s18, 15
    %p99 = por %p97, %p98
    %p100 = scmp.ne.s32.totalorder %s91, %s92
    %p101 = scmp.eq.s32.totalorder %s18, 0
    %p102 = por %p100, %p101
    %p103 = scmp.ne.s32.totalorder %s91, %s92
    %p104 = scmp.eq.s32.totalorder %s19, 15
    %p105 = por %p103, %p104
    %p107 = scmp.ne.s32.totalorder %s92, %s106
    %p108 = scmp.eq.s32.totalorder %s19, 0
    %p109 = por %p107, %p108
    %s111 = sadd.s32 %s110, 1
    %p114 = scmp.eq.s32.totalorder %s13, 15
    %p115 = scmp.ne.s32.totalorder %s110, %s112
    %p116 = scmp.eq.s32.totalorder %s13, 0
    %p117 = por %p115, %p116
    %p118 = scmp.ne.s32.totalorder %s110, %s112
    %p119 = scmp.eq.s32.totalorder %s18, 15
    %p120 = por %p118, %p119
    %p121 = scmp.ne.s32.totalorder %s112, %s113
    %p122 = scmp.eq.s32.totalorder %s18, 0
    %p123 = por %p121, %p122
    %p124 = scmp.ne.s32.totalorder %s112, %s113
    %p125 = scmp.eq.s32.totalorder %s19, 15
    %p126 = por %p124, %p125
    %p128 = scmp.ne.s32.totalorder %s113, %s127
    %p129 = scmp.eq.s32.totalorder %s19, 0
    %p130 = por %p128, %p129
    %s132 = sadd.s32 %s131, 1
    %p135 = scmp.eq.s32.totalorder %s13, 15
    %p136 = scmp.ne.s32.totalorder %s131, %s133
    %p137 = scmp.eq.s32.totalorder %s13, 0
    %p138 = por %p136, %p137
    %p139 = scmp.ne.s32.totalorder %s131, %s133
    %p140 = scmp.eq.s32.totalorder %s18, 15
    %p141 = por %p139, %p140
    %p142 = scmp.ne.s32.totalorder %s133, %s134
    %p143 = scmp.eq.s32.totalorder %s18, 0
    %p144 = por %p142, %p143
    %p145 = scmp.ne.s32.totalorder %s133, %s134
    %p146 = scmp.eq.s32.totalorder %s19, 15
    %p147 = por %p145, %p146
    %p149 = scmp.ne.s32.totalorder %s134, %s148
    %p150 = scmp.eq.s32.totalorder %s19, 0
    %p151 = por %p149, %p150
    %s153 = sadd.s32 %s152, 1
    %p156 = scmp.eq.s32.totalorder %s13, 15
    %p157 = scmp.ne.s32.totalorder %s152, %s154
    %p158 = scmp.eq.s32.totalorder %s13, 0
    %p159 = por %p157, %p158
    %p160 = scmp.ne.s32.totalorder %s152, %s154
    %p161 = scmp.eq.s32.totalorder %s18, 15
    %p162 = por %p160, %p161
    %p163 = scmp.ne.s32.totalorder %s154, %s155
    %p164 = scmp.eq.s32.totalorder %s18, 0
    %p165 = por %p163, %p164
    %p166 = scmp.ne.s32.totalorder %s154, %s155
    %p167 = scmp.eq.s32.totalorder %s19, 15
    %p168 = por %p166, %p167
    %p170 = scmp.ne.s32.totalorder %s155, %s169
    %p171 = scmp.eq.s32.totalorder %s19, 0
    %p172 = por %p170, %p171
    %s173 = ssub.s32 %s13, %s20
    %p174 = scmp.eq.s32.totalorder %s173, 0
    %s176 = sadd.s32 %s175, 1
    %s177 = scalar_select %p174, %s175, %s176
    %p180 = pneg %p174
    %p181 = scmp.eq.s32.totalorder %s13, 15
    %p182 = por %p180, %p181
    %p183 = scmp.ne.s32.totalorder %s175, %s178
    %p184 = scmp.eq.s32.totalorder %s13, 0
    %p185 = por %p183, %p184
    %p186 = scmp.ne.s32.totalorder %s175, %s178
    %p187 = scmp.eq.s32.totalorder %s18, 15
    %p188 = por %p186, %p187
    %p189 = scmp.ne.s32.totalorder %s178, %s179
    %p190 = scmp.eq.s32.totalorder %s18, 0
    %p191 = por %p189, %p190
    %p192 = scmp.ne.s32.totalorder %s178, %s179
    %p193 = scmp.eq.s32.totalorder %s19, 15
    %p194 = por %p192, %p193
    %p196 = scmp.ne.s32.totalorder %s179, %s195
    %p197 = scmp.eq.s32.totalorder %s19, 0
    %p198 = por %p196, %p197
    %p199 = scmp.le.s32.totalorder 1, %s13
    %p200 = scmp.lt.s32.totalorder %s13, 17
    %p201 = pnand %p199, %p200
    %p202 = pneg %p201
    // Predicated region
    $region9: #{mean_variance_forward.1} parent=5 // pred_check
      _
    $region10: #{mean_variance_forward.1} parent=5 // pred_check_branch
      %204 = sbr.rel (%p201) target = $region12
    $region11: #{mean_variance_forward.1} parent=5 // pred_region
      %s205 = ssub.s32 %s13, 1
      // Predicated region
      $region13: #{mean_variance_forward.1} parent=11 // pred_check
        %p206 = pneg %p60
      $region14: #{mean_variance_forward.1} parent=11 // pred_check_branch
        %208 = sbr.rel (%p206) target = $region16
      $region15: #{mean_variance_forward.1} parent=11 // pred_region
        _
      $region16: #{mean_variance_forward.1} parent=11 // pred_fallthru
        _
      // Predicated region
      $region17: #{mean_variance_forward.1} parent=11 // pred_check
        %p209 = pneg %p81
      $region18: #{mean_variance_forward.1} parent=11 // pred_check_branch
        %211 = sbr.rel (%p209) target = $region20
      $region19: #{mean_variance_forward.1} parent=11 // pred_region
        _
      $region20: #{mean_variance_forward.1} parent=11 // pred_fallthru
        _
      // Predicated region
      $region21: #{mean_variance_forward.1} parent=11 // pred_check
        %p212 = pneg %p102
      $region22: #{mean_variance_forward.1} parent=11 // pred_check_branch
        %214 = sbr.rel (%p212) target = $region24
      $region23: #{mean_variance_forward.1} parent=11 // pred_region
        _
      $region24: #{mean_variance_forward.1} parent=11 // pred_fallthru
        _
      // Predicated region
      $region25: #{mean_variance_forward.1} parent=11 // pred_check
        %p215 = pneg %p123
      $region26: #{mean_variance_forward.1} parent=11 // pred_check_branch
        %217 = sbr.rel (%p215) target = $region28
      $region27: #{mean_variance_forward.1} parent=11 // pred_region
        _
      $region28: #{mean_variance_forward.1} parent=11 // pred_fallthru
        _
      // Predicated region
      $region29: #{mean_variance_forward.1} parent=11 // pred_check
        %p218 = pneg %p144
      $region30: #{mean_variance_forward.1} parent=11 // pred_check_branch
        %220 = sbr.rel (%p218) target = $region32
      $region31: #{mean_variance_forward.1} parent=11 // pred_region
        _
      $region32: #{mean_variance_forward.1} parent=11 // pred_fallthru
        _
      // Predicated region
      $region33: #{mean_variance_forward.1} parent=11 // pred_check
        %p221 = pneg %p165
      $region34: #{mean_variance_forward.1} parent=11 // pred_check_branch
        %223 = sbr.rel (%p221) target = $region36
      $region35: #{mean_variance_forward.1} parent=11 // pred_region
        _
      $region36: #{mean_variance_forward.1} parent=11 // pred_fallthru
        _
    $region12: #{mean_variance_forward.1} parent=5 // pred_fallthru
      _
    %p224 = scmp.lt.s32.totalorder %s13, 16
    // Predicated region
    $region37: #{mean_variance_forward.1} parent=5 // pred_check
      %p225 = pneg %p224
    $region38: #{mean_variance_forward.1} parent=5 // pred_check_branch
      %227 = sbr.rel (%p225) target = $region40
    $region39: #{mean_variance_forward.1} parent=5 // pred_region
      // Predicated region
      $region41: #{mean_variance_forward.1} parent=39 // pred_check
        %p228 = pneg %p33
      $region42: #{mean_variance_forward.1} parent=39 // pred_check_branch
        %230 = sbr.rel (%p228) target = $region44
      $region43: #{mean_variance_forward.1} parent=39 // pred_region
        %p231 = scmp.lt.s32.totalorder %s13, 15
        %s232 = scalar_select %p231, %s13, 15
        %s233 = smul.addr %s232, 3
        %s234 = smul.addr %s233, 2
        %s235 = scalar_lea.vmem %s0, %s234
      $region44: #{mean_variance_forward.1} parent=39 // pred_fallthru
        _
    $region40: #{mean_variance_forward.1} parent=5 // pred_fallthru
      _
    %p236 = scmp.le.s32.totalorder 1, %s13
    %p237 = scmp.lt.s32.totalorder %s13, 17
    %p238 = pnand %p236, %p237
    %p239 = pneg %p238
    // Predicated region
    $region45: #{mean_variance_forward.1} parent=5 // pred_check
      _
    $region46: #{mean_variance_forward.1} parent=5 // pred_check_branch
      %241 = sbr.rel (%p238) target = $region48
    $region47: #{mean_variance_forward.1} parent=5 // pred_region
      %s242 = ssub.s32 %s13, 1
      %p243 = scmp.lt.s32.totalorder %s18, 15
      %s244 = scalar_select %p243, %s18, 15
      %s245 = smul.addr %s244, 3
      %s246 = smul.addr %s245, 2
      %s247 = scalar_lea.vmem %s0, %s246
      %p248 = pneg %p39
      %p249 = pneg %p36
      %p250 = pneg %p60
      %p251 = pneg %p57
      %p252 = pneg %p81
      %p253 = pneg %p78
      %p254 = pneg %p102
      %p255 = pneg %p99
      %p256 = pneg %p123
      %p257 = pneg %p120
      %p258 = pneg %p144
      %p259 = pneg %p141
      %p260 = pneg %p165
      %p261 = pneg %p162
      %p262 = pneg %p191
      %p263 = pneg %p188
      %p264 = scmp.lt.s32.totalorder %s18, 15
      %s265 = scalar_select %p264, %s18, 15
      %s266 = smul.addr %s265, 6
      %s267 = smul.addr %s266, 8
      %s268 = scalar_lea.vmem %s7, %s267
      %p269 = scmp.lt.s32.totalorder %s18, 15
      %s270 = scalar_select %p269, %s18, 15
      %s271 = smul.addr %s270, 3
      %s272 = smul.addr %s271, 2
      %s273 = scalar_lea.vmem %s0, %s272
      %p274 = scmp.lt.s32.totalorder %s18, 15
      %s275 = scalar_select %p274, %s18, 15
      %s276 = smul.addr %s275, 6
      %s277 = smul.addr %s276, 8
      %s278 = scalar_lea.vmem %s7, %s277
      %v280 = vld [vmem:[%s273] sm:$0x3f]
      %v281 = vld [vmem:[%s1] sm:$0xf]
      %v282 = vld [vmem:[%s1 + $0x4] sm:$0xf]
      %s283 = scalar_lea.vmem %s1, 8
      %v284 = vld [vmem:[%s283] sm:$0xf]
      %v285 = vld [vmem:[%s283 + $0x4] sm:$0xf]
      %v288 = vunpack.c.l.b16 %v284
      %v289 = vunpack.c.l.b16 %v285
      %v290 = vpack.c.b16 %v289, %v288
      %v292 = vcombine.high %v280, %v280
      %v294 = vunpack.c.l.s4 1983009808
      %v295 = vunpack.c.0.s8 %v294
      %v296 = vlaneseq
      %v297 = vshrl.u32 %v296, 7
      %v298 = vsub.s32 %v295, %v297
      %v299 = vrot.slane %v280, %v298
      %v301 = vunpack.c.l.s4 1983009808
      %v302 = vunpack.c.0.s8 %v301
      %v303 = vlaneseq
      %v304 = vshrl.u32 %v303, 7
      %v305 = vsub.s32 %v302, %v304
      %v306 = vrot.slane %v292, %v305
      %v307 = vcombine.high %v299, %v299
      %308 = vrot.lane.b32.xlu0 %v299, 127
      %v309 = vpop.permute.xlu0 %308
      %310 = vrot.lane.b32.xlu0 %v307, 127
      %v311 = vpop.permute.xlu0 %310
      %312 = vrot.lane.b32.xlu0 %v306, 127
      %v313 = vpop.permute.xlu0 %312
      %vm314 = vcmask 1039360
      %v315 = vsel %vm314, %v309, %v311
      %v316 = vsel %vm314, %v311, %v313
      %vm317 = vcmask 31744
      %v319 = vsel %vm317, %v290, 0
      %vm321 = vcmask 1041408
      %v323 = vsel %vm321, %v315, 0
      %v326 = vsel %vm321, %v316, 0
      %v329 = vsel %vm321, %v313, 0
      %331 = vmatprep.subr.bf16.mxu0 0
      %332 = vmatpush1.bf16.msra.mxu0 0
      %333 = vmatprep.subr.bf16.mxu0 0
      %334 = vmatpush1.bf16.msra.mxu0 0
      %335 = vmatprep.subr.bf16.mxu0 0
      %336 = vmatpush1.bf16.msra.mxu0 0
      %337 = vmatprep.subr.bf16.mxu0 0
      %338 = vmatpush1.bf16.msra.mxu0 0
      %339 = vmatprep.subr.bf16.mxu0 0
      %340 = vmatpush1.bf16.msra.mxu0 0
      %341 = vmatprep.subr.bf16.mxu0 0
      %342 = vmatpush1.bf16.msra.mxu0 0
      %343 = vmatprep.subr.bf16.mxu0 0
      %344 = vmatpush1.bf16.msra.mxu0 0
      %345 = vmatprep.subr.bf16.mxu0 %v326
      %346 = vmatpush1.bf16.msra.mxu0 %v323
      %347 = vmatprep.subr.bf16.mxu0 0
      %348 = vmatpush2.bf16.msra.mxu0 0
      %349 = vmatprep.subr.bf16.mxu0 0
      %350 = vmatpush2.bf16.msra.mxu0 0
      %351 = vmatprep.subr.bf16.mxu0 0
      %352 = vmatpush2.bf16.msra.mxu0 0
      %353 = vmatprep.subr.bf16.mxu0 0
      %354 = vmatpush2.bf16.msra.mxu0 0
      %355 = vmatprep.subr.bf16.mxu0 0
      %356 = vmatpush2.bf16.msra.mxu0 0
      %357 = vmatprep.subr.bf16.mxu0 0
      %358 = vmatpush2.bf16.msra.mxu0 0
      %359 = vmatprep.subr.bf16.mxu0 0
      %360 = vmatpush2.bf16.msra.mxu0 0
      %361 = vmatprep.subr.bf16.mxu0 0
      %362 = vmatpush2.bf16.msra.mxu0 0
      %363 = vmatprep.mubr.bf16.mxu0 0
      %364 = vmatmul.mubr.bf16.gmra.mxu0 %v319
      %v365 = vpop.f32.mrf.mxu0
      %v366 = vadd.f32 0.0, %v365
      %v367 = vpop.f32.mrf.mxu0
      %v368 = vadd.f32 0.0, %v367
      %v369 = vpop.f32.mrf.mxu0
      %v370 = vadd.f32 0.0, %v369
      %v371 = vpop.f32.mrf.mxu0
      %v372 = vadd.f32 0.0, %v371
      %373 = vdwg.mxu0
      %374 = vmatprep.subr.bf16.mxu0 0
      %375 = vmatpush1.bf16.msra.mxu0 0
      %376 = vmatprep.subr.bf16.mxu0 0
      %377 = vmatpush1.bf16.msra.mxu0 0
      %378 = vmatprep.subr.bf16.mxu0 0
      %379 = vmatpush1.bf16.msra.mxu0 0
      %380 = vmatprep.subr.bf16.mxu0 0
      %381 = vmatpush1.bf16.msra.mxu0 0
      %382 = vmatprep.subr.bf16.mxu0 0
      %383 = vmatpush1.bf16.msra.mxu0 0
      %384 = vmatprep.subr.bf16.mxu0 0
      %385 = vmatpush1.bf16.msra.mxu0 0
      %386 = vmatprep.subr.bf16.mxu0 0
      %387 = vmatpush1.bf16.msra.mxu0 0
      %388 = vmatprep.subr.bf16.mxu0 0
      %389 = vmatpush1.bf16.msra.mxu0 %v329
      %390 = vmatprep.subr.bf16.mxu0 0
      %391 = vmatpush2.bf16.msra.mxu0 0
      %392 = vmatprep.subr.bf16.mxu0 0
      %393 = vmatpush2.bf16.msra.mxu0 0
      %394 = vmatprep.subr.bf16.mxu0 0
      %395 = vmatpush2.bf16.msra.mxu0 0
      %396 = vmatprep.subr.bf16.mxu0 0
      %397 = vmatpush2.bf16.msra.mxu0 0
      %398 = vmatprep.subr.bf16.mxu0 0
      %399 = vmatpush2.bf16.msra.mxu0 0
      %400 = vmatprep.subr.bf16.mxu0 0
      %401 = vmatpush2.bf16.msra.mxu0 0
      %402 = vmatprep.subr.bf16.mxu0 0
      %403 = vmatpush2.bf16.msra.mxu0 0
      %404 = vmatprep.subr.bf16.mxu0 0
      %405 = vmatpush2.bf16.msra.mxu0 0
      %406 = vmatprep.mubr.bf16.mxu0 0
      %407 = vmatmul.mubr.bf16.gmra.mxu0 %v319
      %v408 = vpop.f32.mrf.mxu0
      %v409 = vadd.f32 0.0, %v408
      %v410 = vpop.f32.mrf.mxu0
      %v411 = vpop.f32.mrf.mxu0
      %v412 = vadd.f32 0.0, %v411
      %v413 = vpop.f32.mrf.mxu0
      %414 = vdwg.mxu0
      %v417 = vunpack.c.l.b16 %v281
      %v418 = vunpack.c.l.b16 %v282
      %v419 = vpack.c.b16 %v418, %v417
      %v421 = vsel %vm317, %v419, 0
      %v424 = vsel %vm321, %v299, 0
      %v427 = vsel %vm321, %v307, 0
      %v430 = vsel %vm321, %v306, 0
      %432 = vmatprep.subr.bf16.mxu0 0
      %433 = vmatpush1.bf16.msra.mxu0 0
      %434 = vmatprep.subr.bf16.mxu0 0
      %435 = vmatpush1.bf16.msra.mxu0 0
      %436 = vmatprep.subr.bf16.mxu0 0
      %437 = vmatpush1.bf16.msra.mxu0 0
      %438 = vmatprep.subr.bf16.mxu0 0
      %439 = vmatpush1.bf16.msra.mxu0 0
      %440 = vmatprep.subr.bf16.mxu0 0
      %441 = vmatpush1.bf16.msra.mxu0 0
      %442 = vmatprep.subr.bf16.mxu0 0
      %443 = vmatpush1.bf16.msra.mxu0 0
      %444 = vmatprep.subr.bf16.mxu0 0
      %445 = vmatpush1.bf16.msra.mxu0 0
      %446 = vmatprep.subr.bf16.mxu0 %v427
      %447 = vmatpush1.bf16.msra.mxu0 %v424
      %448 = vmatprep.subr.bf16.mxu0 0
      %449 = vmatpush2.bf16.msra.mxu0 0
      %450 = vmatprep.subr.bf16.mxu0 0
      %451 = vmatpush2.bf16.msra.mxu0 0
      %452 = vmatprep.subr.bf16.mxu0 0
      %453 = vmatpush2.bf16.msra.mxu0 0
      %454 = vmatprep.subr.bf16.mxu0 0
      %455 = vmatpush2.bf16.msra.mxu0 0
      %456 = vmatprep.subr.bf16.mxu0 0
      %457 = vmatpush2.bf16.msra.mxu0 0
      %458 = vmatprep.subr.bf16.mxu0 0
      %459 = vmatpush2.bf16.msra.mxu0 0
      %460 = vmatprep.subr.bf16.mxu0 0
      %461 = vmatpush2.bf16.msra.mxu0 0
      %462 = vmatprep.subr.bf16.mxu0 0
      %463 = vmatpush2.bf16.msra.mxu0 0
      %464 = vmatprep.mubr.bf16.mxu0 0
      %465 = vmatmul.mubr.bf16.gmra.mxu0 %v421
      %v466 = vpop.f32.mrf.mxu0
      %v467 = vadd.f32 %v366, %v466
      %v468 = vpop.f32.mrf.mxu0
      %v469 = vadd.f32 %v368, %v468
      %v470 = vpop.f32.mrf.mxu0
      %v471 = vadd.f32 %v370, %v470
      %v472 = vpop.f32.mrf.mxu0
      %v473 = vadd.f32 %v372, %v472
      %474 = vdwg.mxu0
      %475 = vmatprep.subr.bf16.mxu0 0
      %476 = vmatpush1.bf16.msra.mxu0 0
      %477 = vmatprep.subr.bf16.mxu0 0
      %478 = vmatpush1.bf16.msra.mxu0 0
      %479 = vmatprep.subr.bf16.mxu0 0
      %480 = vmatpush1.bf16.msra.mxu0 0
      %481 = vmatprep.subr.bf16.mxu0 0
      %482 = vmatpush1.bf16.msra.mxu0 0
      %483 = vmatprep.subr.bf16.mxu0 0
      %484 = vmatpush1.bf16.msra.mxu0 0
      %485 = vmatprep.subr.bf16.mxu0 0
      %486 = vmatpush1.bf16.msra.mxu0 0
      %487 = vmatprep.subr.bf16.mxu0 0
      %488 = vmatpush1.bf16.msra.mxu0 0
      %489 = vmatprep.subr.bf16.mxu0 0
      %490 = vmatpush1.bf16.msra.mxu0 %v430
      %491 = vmatprep.subr.bf16.mxu0 0
      %492 = vmatpush2.bf16.msra.mxu0 0
      %493 = vmatprep.subr.bf16.mxu0 0
      %494 = vmatpush2.bf16.msra.mxu0 0
      %495 = vmatprep.subr.bf16.mxu0 0
      %496 = vmatpush2.bf16.msra.mxu0 0
      %497 = vmatprep.subr.bf16.mxu0 0
      %498 = vmatpush2.bf16.msra.mxu0 0
      %499 = vmatprep.subr.bf16.mxu0 0
      %500 = vmatpush2.bf16.msra.mxu0 0
      %501 = vmatprep.subr.bf16.mxu0 0
      %502 = vmatpush2.bf16.msra.mxu0 0
      %503 = vmatprep.subr.bf16.mxu0 0
      %504 = vmatpush2.bf16.msra.mxu0 0
      %505 = vmatprep.subr.bf16.mxu0 0
      %506 = vmatpush2.bf16.msra.mxu0 0
      %507 = vmatprep.mubr.bf16.mxu0 0
      %508 = vmatmul.mubr.bf16.gmra.mxu0 %v421
      %v509 = vpop.f32.mrf.mxu0
      %v510 = vadd.f32 %v409, %v509
      %v511 = vpop.f32.mrf.mxu0
      %v512 = vpop.f32.mrf.mxu0
      %v513 = vadd.f32 %v412, %v512
      %v514 = vpop.f32.mrf.mxu0
      %515 = vdwg.mxu0
      %v516 = vld [vmem:[%s273] sm:$0x3f]
      %s517 = scalar_lea.vmem %s1, 16
      %v518 = vld [vmem:[%s517] sm:$0xf]
      %v519 = vld [vmem:[%s517 + $0x4] sm:$0xf]
      %v522 = vunpack.c.l.b16 %v518
      %v523 = vunpack.c.l.b16 %v519
      %v524 = vpack.c.b16 %v523, %v522
      %v526 = vcombine.high %v516, %v516
      %v528 = vunpack.c.l.s4 1983009808
      %v529 = vunpack.c.0.s8 %v528
      %v530 = vlaneseq
      %v531 = vshrl.u32 %v530, 7
      %v532 = vsub.s32 %v529, %v531
      %v533 = vrot.slane %v516, %v532
      %v535 = vunpack.c.l.s4 1983009808
      %v536 = vunpack.c.0.s8 %v535
      %v537 = vlaneseq
      %v538 = vshrl.u32 %v537, 7
      %v539 = vsub.s32 %v536, %v538
      %v540 = vrot.slane %v526, %v539
      %v541 = vcombine.high %v533, %v533
      %542 = vrot.lane.b32.xlu0 %v533, 126
      %v543 = vpop.permute.xlu0 %542
      %544 = vrot.lane.b32.xlu0 %v541, 126
      %v545 = vpop.permute.xlu0 %544
      %546 = vrot.lane.b32.xlu0 %v540, 126
      %v547 = vpop.permute.xlu0 %546
      %vm548 = vcmask 1031168
      %v549 = vsel %vm548, %v543, %v545
      %v550 = vsel %vm548, %v545, %v547
      %v552 = vsel %vm317, %v524, 0
      %v555 = vsel %vm321, %v549, 0
      %v558 = vsel %vm321, %v550, 0
      %v561 = vsel %vm321, %v547, 0
      %563 = vmatprep.subr.bf16.mxu0 0
      %564 = vmatpush1.bf16.msra.mxu0 0
      %565 = vmatprep.subr.bf16.mxu0 0
      %566 = vmatpush1.bf16.msra.mxu0 0
      %567 = vmatprep.subr.bf16.mxu0 0
      %568 = vmatpush1.bf16.msra.mxu0 0
      %569 = vmatprep.subr.bf16.mxu0 0
      %570 = vmatpush1.bf16.msra.mxu0 0
      %571 = vmatprep.subr.bf16.mxu0 0
      %572 = vmatpush1.bf16.msra.mxu0 0
      %573 = vmatprep.subr.bf16.mxu0 0
      %574 = vmatpush1.bf16.msra.mxu0 0
      %575 = vmatprep.subr.bf16.mxu0 0
      %576 = vmatpush1.bf16.msra.mxu0 0
      %577 = vmatprep.subr.bf16.mxu0 %v558
      %578 = vmatpush1.bf16.msra.mxu0 %v555
      %579 = vmatprep.subr.bf16.mxu0 0
      %580 = vmatpush2.bf16.msra.mxu0 0
      %581 = vmatprep.subr.bf16.mxu0 0
      %582 = vmatpush2.bf16.msra.mxu0 0
      %583 = vmatprep.subr.bf16.mxu0 0
      %584 = vmatpush2.bf16.msra.mxu0 0
      %585 = vmatprep.subr.bf16.mxu0 0
      %586 = vmatpush2.bf16.msra.mxu0 0
      %587 = vmatprep.subr.bf16.mxu0 0
      %588 = vmatpush2.bf16.msra.mxu0 0
      %589 = vmatprep.subr.bf16.mxu0 0
      %590 = vmatpush2.bf16.msra.mxu0 0
      %591 = vmatprep.subr.bf16.mxu0 0
      %592 = vmatpush2.bf16.msra.mxu0 0
      %593 = vmatprep.subr.bf16.mxu0 0
      %594 = vmatpush2.bf16.msra.mxu0 0
      %595 = vmatprep.mubr.bf16.mxu0 0
      %596 = vmatmul.mubr.bf16.gmra.mxu0 %v552
      %v597 = vpop.f32.mrf.mxu0
      %v598 = vadd.f32 0.0, %v597
      %v599 = vpop.f32.mrf.mxu0
      %v600 = vadd.f32 0.0, %v599
      %v601 = vpop.f32.mrf.mxu0
      %v602 = vadd.f32 0.0, %v601
      %v603 = vpop.f32.mrf.mxu0
      %v604 = vadd.f32 0.0, %v603
      %605 = vdwg.mxu0
      %606 = vmatprep.subr.bf16.mxu0 0
      %607 = vmatpush1.bf16.msra.mxu0 0
      %608 = vmatprep.subr.bf16.mxu0 0
      %609 = vmatpush1.bf16.msra.mxu0 0
      %610 = vmatprep.subr.bf16.mxu0 0
      %611 = vmatpush1.bf16.msra.mxu0 0
      %612 = vmatprep.subr.bf16.mxu0 0
      %613 = vmatpush1.bf16.msra.mxu0 0
      %614 = vmatprep.subr.bf16.mxu0 0
      %615 = vmatpush1.bf16.msra.mxu0 0
      %616 = vmatprep.subr.bf16.mxu0 0
      %617 = vmatpush1.bf16.msra.mxu0 0
      %618 = vmatprep.subr.bf16.mxu0 0
      %619 = vmatpush1.bf16.msra.mxu0 0
      %620 = vmatprep.subr.bf16.mxu0 0
      %621 = vmatpush1.bf16.msra.mxu0 %v561
      %622 = vmatprep.subr.bf16.mxu0 0
      %623 = vmatpush2.bf16.msra.mxu0 0
      %624 = vmatprep.subr.bf16.mxu0 0
      %625 = vmatpush2.bf16.msra.mxu0 0
      %626 = vmatprep.subr.bf16.mxu0 0
      %627 = vmatpush2.bf16.msra.mxu0 0
      %628 = vmatprep.subr.bf16.mxu0 0
      %629 = vmatpush2.bf16.msra.mxu0 0
      %630 = vmatprep.subr.bf16.mxu0 0
      %631 = vmatpush2.bf16.msra.mxu0 0
      %632 = vmatprep.subr.bf16.mxu0 0
      %633 = vmatpush2.bf16.msra.mxu0 0
      %634 = vmatprep.subr.bf16.mxu0 0
      %635 = vmatpush2.bf16.msra.mxu0 0
      %636 = vmatprep.subr.bf16.mxu0 0
      %637 = vmatpush2.bf16.msra.mxu0 0
      %638 = vmatprep.mubr.bf16.mxu0 0
      %639 = vmatmul.mubr.bf16.gmra.mxu0 %v552
      %v640 = vpop.f32.mrf.mxu0
      %v641 = vadd.f32 0.0, %v640
      %v642 = vpop.f32.mrf.mxu0
      %v643 = vpop.f32.mrf.mxu0
      %v644 = vadd.f32 0.0, %v643
      %v645 = vpop.f32.mrf.mxu0
      %646 = vdwg.mxu0
      %v647 = vadd.f32 %v467, %v598
      %v648 = vadd.f32 %v469, %v600
      %v649 = vadd.f32 %v510, %v641
      %v650 = vadd.f32 %v471, %v602
      %v651 = vadd.f32 %v473, %v604
      %v652 = vadd.f32 %v513, %v644
      %v653 = vld [vmem:[%s273] sm:$0x3f]
      %s654 = scalar_lea.vmem %s1, 24
      %v655 = vld [vmem:[%s654] sm:$0xf]
      %v656 = vld [vmem:[%s654 + $0x4] sm:$0xf]
      %v659 = vunpack.c.l.b16 %v655
      %v660 = vunpack.c.l.b16 %v656
      %v661 = vpack.c.b16 %v660, %v659
      %v663 = vcombine.high %v653, %v653
      %v665 = vunpack.c.l.s4 1983009808
      %v666 = vunpack.c.0.s8 %v665
      %v667 = vlaneseq
      %v668 = vshrl.u32 %v667, 7
      %v669 = vsub.s32 %v666, %v668
      %v670 = vrot.slane %v653, %v669
      %v672 = vunpack.c.l.s4 1983009808
      %v673 = vunpack.c.0.s8 %v672
      %v674 = vlaneseq
      %v675 = vshrl.u32 %v674, 7
      %v676 = vsub.s32 %v673, %v675
      %v677 = vrot.slane %v663, %v676
      %v678 = vcombine.high %v670, %v670
      %679 = vrot.lane.b32.xlu0 %v670, 111
      %v680 = vpop.permute.xlu0 %679
      %681 = vrot.lane.b32.xlu0 %v678, 111
      %v682 = vpop.permute.xlu0 %681
      %683 = vrot.lane.b32.xlu0 %v677, 111
      %v684 = vpop.permute.xlu0 %683
      %vm685 = vcmask 908288
      %v686 = vsel %vm685, %v680, %v682
      %v687 = vsel %vm685, %v682, %v684
      %v689 = vsel %vm317, %v661, 0
      %v692 = vsel %vm321, %v686, 0
      %v695 = vsel %vm321, %v687, 0
      %v698 = vsel %vm321, %v684, 0
      %700 = vmatprep.subr.bf16.mxu0 0
      %701 = vmatpush1.bf16.msra.mxu0 0
      %702 = vmatprep.subr.bf16.mxu0 0
      %703 = vmatpush1.bf16.msra.mxu0 0
      %704 = vmatprep.subr.bf16.mxu0 0
      %705 = vmatpush1.bf16.msra.mxu0 0
      %706 = vmatprep.subr.bf16.mxu0 0
      %707 = vmatpush1.bf16.msra.mxu0 0
      %708 = vmatprep.subr.bf16.mxu0 0
      %709 = vmatpush1.bf16.msra.mxu0 0
      %710 = vmatprep.subr.bf16.mxu0 0
      %711 = vmatpush1.bf16.msra.mxu0 0
      %712 = vmatprep.subr.bf16.mxu0 0
      %713 = vmatpush1.bf16.msra.mxu0 0
      %714 = vmatprep.subr.bf16.mxu0 %v695
      %715 = vmatpush1.bf16.msra.mxu0 %v692
      %716 = vmatprep.subr.bf16.mxu0 0
      %717 = vmatpush2.bf16.msra.mxu0 0
      %718 = vmatprep.subr.bf16.mxu0 0
      %719 = vmatpush2.bf16.msra.mxu0 0
      %720 = vmatprep.subr.bf16.mxu0 0
      %721 = vmatpush2.bf16.msra.mxu0 0
      %722 = vmatprep.subr.bf16.mxu0 0
      %723 = vmatpush2.bf16.msra.mxu0 0
      %724 = vmatprep.subr.bf16.mxu0 0
      %725 = vmatpush2.bf16.msra.mxu0 0
      %726 = vmatprep.subr.bf16.mxu0 0
      %727 = vmatpush2.bf16.msra.mxu0 0
      %728 = vmatprep.subr.bf16.mxu0 0
      %729 = vmatpush2.bf16.msra.mxu0 0
      %730 = vmatprep.subr.bf16.mxu0 0
      %731 = vmatpush2.bf16.msra.mxu0 0
      %732 = vmatprep.mubr.bf16.mxu0 0
      %733 = vmatmul.mubr.bf16.gmra.mxu0 %v689
      %v734 = vpop.f32.mrf.mxu0
      %v735 = vadd.f32 0.0, %v734
      %v736 = vpop.f32.mrf.mxu0
      %v737 = vadd.f32 0.0, %v736
      %v738 = vpop.f32.mrf.mxu0
      %v739 = vadd.f32 0.0, %v738
      %v740 = vpop.f32.mrf.mxu0
      %v741 = vadd.f32 0.0, %v740
      %742 = vdwg.mxu0
      %743 = vmatprep.subr.bf16.mxu0 0
      %744 = vmatpush1.bf16.msra.mxu0 0
      %745 = vmatprep.subr.bf16.mxu0 0
      %746 = vmatpush1.bf16.msra.mxu0 0
      %747 = vmatprep.subr.bf16.mxu0 0
      %748 = vmatpush1.bf16.msra.mxu0 0
      %749 = vmatprep.subr.bf16.mxu0 0
      %750 = vmatpush1.bf16.msra.mxu0 0
      %751 = vmatprep.subr.bf16.mxu0 0
      %752 = vmatpush1.bf16.msra.mxu0 0
      %753 = vmatprep.subr.bf16.mxu0 0
      %754 = vmatpush1.bf16.msra.mxu0 0
      %755 = vmatprep.subr.bf16.mxu0 0
      %756 = vmatpush1.bf16.msra.mxu0 0
      %757 = vmatprep.subr.bf16.mxu0 0
      %758 = vmatpush1.bf16.msra.mxu0 %v698
      %759 = vmatprep.subr.bf16.mxu0 0
      %760 = vmatpush2.bf16.msra.mxu0 0
      %761 = vmatprep.subr.bf16.mxu0 0
      %762 = vmatpush2.bf16.msra.mxu0 0
      %763 = vmatprep.subr.bf16.mxu0 0
      %764 = vmatpush2.bf16.msra.mxu0 0
      %765 = vmatprep.subr.bf16.mxu0 0
      %766 = vmatpush2.bf16.msra.mxu0 0
      %767 = vmatprep.subr.bf16.mxu0 0
      %768 = vmatpush2.bf16.msra.mxu0 0
      %769 = vmatprep.subr.bf16.mxu0 0
      %770 = vmatpush2.bf16.msra.mxu0 0
      %771 = vmatprep.subr.bf16.mxu0 0
      %772 = vmatpush2.bf16.msra.mxu0 0
      %773 = vmatprep.subr.bf16.mxu0 0
      %774 = vmatpush2.bf16.msra.mxu0 0
      %775 = vmatprep.mubr.bf16.mxu0 0
      %776 = vmatmul.mubr.bf16.gmra.mxu0 %v689
      %v777 = vpop.f32.mrf.mxu0
      %v778 = vadd.f32 0.0, %v777
      %v779 = vpop.f32.mrf.mxu0
      %v780 = vpop.f32.mrf.mxu0
      %v781 = vadd.f32 0.0, %v780
      %v782 = vpop.f32.mrf.mxu0
      %783 = vdwg.mxu0
      %v784 = vadd.f32 %v647, %v735
      %v785 = vadd.f32 %v648, %v737
      %v786 = vadd.f32 %v649, %v778
      %v787 = vadd.f32 %v650, %v739
      %v788 = vadd.f32 %v651, %v741
      %v789 = vadd.f32 %v652, %v781
      %v790 = vld [vmem:[%s273] sm:$0x3f]
      %s791 = scalar_lea.vmem %s1, 32
      %v792 = vld [vmem:[%s791] sm:$0xf]
      %v793 = vld [vmem:[%s791 + $0x4] sm:$0xf]
      %v796 = vunpack.c.l.b16 %v792
      %v797 = vunpack.c.l.b16 %v793
      %v798 = vpack.c.b16 %v797, %v796
      %v800 = vcombine.high %v790, %v790
      %v802 = vunpack.c.l.s4 1983009808
      %v803 = vunpack.c.0.s8 %v802
      %v804 = vlaneseq
      %v805 = vshrl.u32 %v804, 7
      %v806 = vsub.s32 %v803, %v805
      %v807 = vrot.slane %v790, %v806
      %v809 = vunpack.c.l.s4 1983009808
      %v810 = vunpack.c.0.s8 %v809
      %v811 = vlaneseq
      %v812 = vshrl.u32 %v811, 7
      %v813 = vsub.s32 %v810, %v812
      %v814 = vrot.slane %v800, %v813
      %v815 = vcombine.high %v807, %v807
      %816 = vrot.lane.b32.xlu0 %v807, 110
      %v817 = vpop.permute.xlu0 %816
      %818 = vrot.lane.b32.xlu0 %v815, 110
      %v819 = vpop.permute.xlu0 %818
      %820 = vrot.lane.b32.xlu0 %v814, 110
      %v821 = vpop.permute.xlu0 %820
      %vm822 = vcmask 900096
      %v823 = vsel %vm822, %v817, %v819
      %v824 = vsel %vm822, %v819, %v821
      %v826 = vsel %vm317, %v798, 0
      %v829 = vsel %vm321, %v823, 0
      %v832 = vsel %vm321, %v824, 0
      %v835 = vsel %vm321, %v821, 0
      %837 = vmatprep.subr.bf16.mxu0 0
      %838 = vmatpush1.bf16.msra.mxu0 0
      %839 = vmatprep.subr.bf16.mxu0 0
      %840 = vmatpush1.bf16.msra.mxu0 0
      %841 = vmatprep.subr.bf16.mxu0 0
      %842 = vmatpush1.bf16.msra.mxu0 0
      %843 = vmatprep.subr.bf16.mxu0 0
      %844 = vmatpush1.bf16.msra.mxu0 0
      %845 = vmatprep.subr.bf16.mxu0 0
      %846 = vmatpush1.bf16.msra.mxu0 0
      %847 = vmatprep.subr.bf16.mxu0 0
      %848 = vmatpush1.bf16.msra.mxu0 0
      %849 = vmatprep.subr.bf16.mxu0 0
      %850 = vmatpush1.bf16.msra.mxu0 0
      %851 = vmatprep.subr.bf16.mxu0 %v832
      %852 = vmatpush1.bf16.msra.mxu0 %v829
      %853 = vmatprep.subr.bf16.mxu0 0
      %854 = vmatpush2.bf16.msra.mxu0 0
      %855 = vmatprep.subr.bf16.mxu0 0
      %856 = vmatpush2.bf16.msra.mxu0 0
      %857 = vmatprep.subr.bf16.mxu0 0
      %858 = vmatpush2.bf16.msra.mxu0 0
      %859 = vmatprep.subr.bf16.mxu0 0
      %860 = vmatpush2.bf16.msra.mxu0 0
      %861 = vmatprep.subr.bf16.mxu0 0
      %862 = vmatpush2.bf16.msra.mxu0 0
      %863 = vmatprep.subr.bf16.mxu0 0
      %864 = vmatpush2.bf16.msra.mxu0 0
      %865 = vmatprep.subr.bf16.mxu0 0
      %866 = vmatpush2.bf16.msra.mxu0 0
      %867 = vmatprep.subr.bf16.mxu0 0
      %868 = vmatpush2.bf16.msra.mxu0 0
      %869 = vmatprep.mubr.bf16.mxu0 0
      %870 = vmatmul.mubr.bf16.gmra.mxu0 %v826
      %v871 = vpop.f32.mrf.mxu0
      %v872 = vadd.f32 0.0, %v871
      %v873 = vpop.f32.mrf.mxu0
      %v874 = vadd.f32 0.0, %v873
      %v875 = vpop.f32.mrf.mxu0
      %v876 = vadd.f32 0.0, %v875
      %v877 = vpop.f32.mrf.mxu0
      %v878 = vadd.f32 0.0, %v877
      %879 = vdwg.mxu0
      %880 = vmatprep.subr.bf16.mxu0 0
      %881 = vmatpush1.bf16.msra.mxu0 0
      %882 = vmatprep.subr.bf16.mxu0 0
      %883 = vmatpush1.bf16.msra.mxu0 0
      %884 = vmatprep.subr.bf16.mxu0 0
      %885 = vmatpush1.bf16.msra.mxu0 0
      %886 = vmatprep.subr.bf16.mxu0 0
      %887 = vmatpush1.bf16.msra.mxu0 0
      %888 = vmatprep.subr.bf16.mxu0 0
      %889 = vmatpush1.bf16.msra.mxu0 0
      %890 = vmatprep.subr.bf16.mxu0 0
      %891 = vmatpush1.bf16.msra.mxu0 0
      %892 = vmatprep.subr.bf16.mxu0 0
      %893 = vmatpush1.bf16.msra.mxu0 0
      %894 = vmatprep.subr.bf16.mxu0 0
      %895 = vmatpush1.bf16.msra.mxu0 %v835
      %896 = vmatprep.subr.bf16.mxu0 0
      %897 = vmatpush2.bf16.msra.mxu0 0
      %898 = vmatprep.subr.bf16.mxu0 0
      %899 = vmatpush2.bf16.msra.mxu0 0
      %900 = vmatprep.subr.bf16.mxu0 0
      %901 = vmatpush2.bf16.msra.mxu0 0
      %902 = vmatprep.subr.bf16.mxu0 0
      %903 = vmatpush2.bf16.msra.mxu0 0
      %904 = vmatprep.subr.bf16.mxu0 0
      %905 = vmatpush2.bf16.msra.mxu0 0
      %906 = vmatprep.subr.bf16.mxu0 0
      %907 = vmatpush2.bf16.msra.mxu0 0
      %908 = vmatprep.subr.bf16.mxu0 0
      %909 = vmatpush2.bf16.msra.mxu0 0
      %910 = vmatprep.subr.bf16.mxu0 0
      %911 = vmatpush2.bf16.msra.mxu0 0
      %912 = vmatprep.mubr.bf16.mxu0 0
      %913 = vmatmul.mubr.bf16.gmra.mxu0 %v826
      %v914 = vpop.f32.mrf.mxu0
      %v915 = vadd.f32 0.0, %v914
      %v916 = vpop.f32.mrf.mxu0
      %v917 = vpop.f32.mrf.mxu0
      %v918 = vadd.f32 0.0, %v917
      %v919 = vpop.f32.mrf.mxu0
      %920 = vdwg.mxu0
      %v921 = vadd.f32 %v784, %v872
      %v922 = vadd.f32 %v785, %v874
      %v923 = vadd.f32 %v786, %v915
      %v924 = vadd.f32 %v787, %v876
      %v925 = vadd.f32 %v788, %v878
      %v926 = vadd.f32 %v789, %v918
      %v927 = vld [vmem:[%s273] sm:$0x3f]
      %s928 = scalar_lea.vmem %s1, 40
      %v929 = vld [vmem:[%s928] sm:$0xf]
      %v930 = vld [vmem:[%s928 + $0x4] sm:$0xf]
      %v933 = vunpack.c.l.b16 %v929
      %v934 = vunpack.c.l.b16 %v930
      %v935 = vpack.c.b16 %v934, %v933
      %v937 = vcombine.high %v927, %v927
      %v939 = vunpack.c.l.s4 1983009808
      %v940 = vunpack.c.0.s8 %v939
      %v941 = vlaneseq
      %v942 = vshrl.u32 %v941, 7
      %v943 = vsub.s32 %v940, %v942
      %v944 = vrot.slane %v927, %v943
      %v946 = vunpack.c.l.s4 1983009808
      %v947 = vunpack.c.0.s8 %v946
      %v948 = vlaneseq
      %v949 = vshrl.u32 %v948, 7
      %v950 = vsub.s32 %v947, %v949
      %v951 = vrot.slane %v937, %v950
      %v952 = vcombine.high %v944, %v944
      %953 = vrot.lane.b32.xlu0 %v944, 109
      %v954 = vpop.permute.xlu0 %953
      %955 = vrot.lane.b32.xlu0 %v952, 109
      %v956 = vpop.permute.xlu0 %955
      %957 = vrot.lane.b32.xlu0 %v951, 109
      %v958 = vpop.permute.xlu0 %957
      %vm959 = vcmask 891904
      %v960 = vsel %vm959, %v954, %v956
      %v961 = vsel %vm959, %v956, %v958
      %v963 = vsel %vm317, %v935, 0
      %v966 = vsel %vm321, %v960, 0
      %v969 = vsel %vm321, %v961, 0
      %v972 = vsel %vm321, %v958, 0
      %974 = vmatprep.subr.bf16.mxu0 0
      %975 = vmatpush1.bf16.msra.mxu0 0
      %976 = vmatprep.subr.bf16.mxu0 0
      %977 = vmatpush1.bf16.msra.mxu0 0
      %978 = vmatprep.subr.bf16.mxu0 0
      %979 = vmatpush1.bf16.msra.mxu0 0
      %980 = vmatprep.subr.bf16.mxu0 0
      %981 = vmatpush1.bf16.msra.mxu0 0
      %982 = vmatprep.subr.bf16.mxu0 0
      %983 = vmatpush1.bf16.msra.mxu0 0
      %984 = vmatprep.subr.bf16.mxu0 0
      %985 = vmatpush1.bf16.msra.mxu0 0
      %986 = vmatprep.subr.bf16.mxu0 0
      %987 = vmatpush1.bf16.msra.mxu0 0
      %988 = vmatprep.subr.bf16.mxu0 %v969
      %989 = vmatpush1.bf16.msra.mxu0 %v966
      %990 = vmatprep.subr.bf16.mxu0 0
      %991 = vmatpush2.bf16.msra.mxu0 0
      %992 = vmatprep.subr.bf16.mxu0 0
      %993 = vmatpush2.bf16.msra.mxu0 0
      %994 = vmatprep.subr.bf16.mxu0 0
      %995 = vmatpush2.bf16.msra.mxu0 0
      %996 = vmatprep.subr.bf16.mxu0 0
      %997 = vmatpush2.bf16.msra.mxu0 0
      %998 = vmatprep.subr.bf16.mxu0 0
      %999 = vmatpush2.bf16.msra.mxu0 0
      %1000 = vmatprep.subr.bf16.mxu0 0
      %1001 = vmatpush2.bf16.msra.mxu0 0
      %1002 = vmatprep.subr.bf16.mxu0 0
      %1003 = vmatpush2.bf16.msra.mxu0 0
      %1004 = vmatprep.subr.bf16.mxu0 0
      %1005 = vmatpush2.bf16.msra.mxu0 0
      %1006 = vmatprep.mubr.bf16.mxu0 0
      %1007 = vmatmul.mubr.bf16.gmra.mxu0 %v963
      %v1008 = vpop.f32.mrf.mxu0
      %v1009 = vadd.f32 0.0, %v1008
      %v1010 = vpop.f32.mrf.mxu0
      %v1011 = vadd.f32 0.0, %v1010
      %v1012 = vpop.f32.mrf.mxu0
      %v1013 = vadd.f32 0.0, %v1012
      %v1014 = vpop.f32.mrf.mxu0
      %v1015 = vadd.f32 0.0, %v1014
      %1016 = vdwg.mxu0
      %1017 = vmatprep.subr.bf16.mxu0 0
      %1018 = vmatpush1.bf16.msra.mxu0 0
      %1019 = vmatprep.subr.bf16.mxu0 0
      %1020 = vmatpush1.bf16.msra.mxu0 0
      %1021 = vmatprep.subr.bf16.mxu0 0
      %1022 = vmatpush1.bf16.msra.mxu0 0
      %1023 = vmatprep.subr.bf16.mxu0 0
      %1024 = vmatpush1.bf16.msra.mxu0 0
      %1025 = vmatprep.subr.bf16.mxu0 0
      %1026 = vmatpush1.bf16.msra.mxu0 0
      %1027 = vmatprep.subr.bf16.mxu0 0
      %1028 = vmatpush1.bf16.msra.mxu0 0
      %1029 = vmatprep.subr.bf16.mxu0 0
      %1030 = vmatpush1.bf16.msra.mxu0 0
      %1031 = vmatprep.subr.bf16.mxu0 0
      %1032 = vmatpush1.bf16.msra.mxu0 %v972
      %1033 = vmatprep.subr.bf16.mxu0 0
      %1034 = vmatpush2.bf16.msra.mxu0 0
      %1035 = vmatprep.subr.bf16.mxu0 0
      %1036 = vmatpush2.bf16.msra.mxu0 0
      %1037 = vmatprep.subr.bf16.mxu0 0
      %1038 = vmatpush2.bf16.msra.mxu0 0
      %1039 = vmatprep.subr.bf16.mxu0 0
      %1040 = vmatpush2.bf16.msra.mxu0 0
      %1041 = vmatprep.subr.bf16.mxu0 0
      %1042 = vmatpush2.bf16.msra.mxu0 0
      %1043 = vmatprep.subr.bf16.mxu0 0
      %1044 = vmatpush2.bf16.msra.mxu0 0
      %1045 = vmatprep.subr.bf16.mxu0 0
      %1046 = vmatpush2.bf16.msra.mxu0 0
      %1047 = vmatprep.subr.bf16.mxu0 0
      %1048 = vmatpush2.bf16.msra.mxu0 0
      %1049 = vmatprep.mubr.bf16.mxu0 0
      %1050 = vmatmul.mubr.bf16.gmra.mxu0 %v963
      %v1051 = vpop.f32.mrf.mxu0
      %v1052 = vadd.f32 0.0, %v1051
      %v1053 = vpop.f32.mrf.mxu0
      %v1054 = vpop.f32.mrf.mxu0
      %v1055 = vadd.f32 0.0, %v1054
      %v1056 = vpop.f32.mrf.mxu0
      %1057 = vdwg.mxu0
      %v1058 = vadd.f32 %v921, %v1009
      %v1059 = vadd.f32 %v922, %v1011
      %v1060 = vadd.f32 %v923, %v1052
      %v1061 = vadd.f32 %v924, %v1013
      %v1062 = vadd.f32 %v925, %v1015
      %v1063 = vadd.f32 %v926, %v1055
      %v1064 = vld [vmem:[%s273] sm:$0x3f]
      %s1065 = scalar_lea.vmem %s1, 48
      %v1066 = vld [vmem:[%s1065] sm:$0xf]
      %v1067 = vld [vmem:[%s1065 + $0x4] sm:$0xf]
      %v1070 = vunpack.c.l.b16 %v1066
      %v1071 = vunpack.c.l.b16 %v1067
      %v1072 = vpack.c.b16 %v1071, %v1070
      %v1074 = vcombine.high %v1064, %v1064
      %v1076 = vunpack.c.l.s4 1983009808
      %v1077 = vunpack.c.0.s8 %v1076
      %v1078 = vlaneseq
      %v1079 = vshrl.u32 %v1078, 7
      %v1080 = vsub.s32 %v1077, %v1079
      %v1081 = vrot.slane %v1064, %v1080
      %v1083 = vunpack.c.l.s4 1983009808
      %v1084 = vunpack.c.0.s8 %v1083
      %v1085 = vlaneseq
      %v1086 = vshrl.u32 %v1085, 7
      %v1087 = vsub.s32 %v1084, %v1086
      %v1088 = vrot.slane %v1074, %v1087
      %v1089 = vcombine.high %v1081, %v1081
      %1090 = vrot.lane.b32.xlu0 %v1081, 94
      %v1091 = vpop.permute.xlu0 %1090
      %1092 = vrot.lane.b32.xlu0 %v1089, 94
      %v1093 = vpop.permute.xlu0 %1092
      %1094 = vrot.lane.b32.xlu0 %v1088, 94
      %v1095 = vpop.permute.xlu0 %1094
      %vm1096 = vcmask 769024
      %v1097 = vsel %vm1096, %v1091, %v1093
      %v1098 = vsel %vm1096, %v1093, %v1095
      %v1100 = vsel %vm317, %v1072, 0
      %v1103 = vsel %vm321, %v1097, 0
      %v1106 = vsel %vm321, %v1098, 0
      %v1109 = vsel %vm321, %v1095, 0
      %1111 = vmatprep.subr.bf16.mxu0 0
      %1112 = vmatpush1.bf16.msra.mxu0 0
      %1113 = vmatprep.subr.bf16.mxu0 0
      %1114 = vmatpush1.bf16.msra.mxu0 0
      %1115 = vmatprep.subr.bf16.mxu0 0
      %1116 = vmatpush1.bf16.msra.mxu0 0
      %1117 = vmatprep.subr.bf16.mxu0 0
      %1118 = vmatpush1.bf16.msra.mxu0 0
      %1119 = vmatprep.subr.bf16.mxu0 0
      %1120 = vmatpush1.bf16.msra.mxu0 0
      %1121 = vmatprep.subr.bf16.mxu0 0
      %1122 = vmatpush1.bf16.msra.mxu0 0
      %1123 = vmatprep.subr.bf16.mxu0 0
      %1124 = vmatpush1.bf16.msra.mxu0 0
      %1125 = vmatprep.subr.bf16.mxu0 %v1106
      %1126 = vmatpush1.bf16.msra.mxu0 %v1103
      %1127 = vmatprep.subr.bf16.mxu0 0
      %1128 = vmatpush2.bf16.msra.mxu0 0
      %1129 = vmatprep.subr.bf16.mxu0 0
      %1130 = vmatpush2.bf16.msra.mxu0 0
      %1131 = vmatprep.subr.bf16.mxu0 0
      %1132 = vmatpush2.bf16.msra.mxu0 0
      %1133 = vmatprep.subr.bf16.mxu0 0
      %1134 = vmatpush2.bf16.msra.mxu0 0
      %1135 = vmatprep.subr.bf16.mxu0 0
      %1136 = vmatpush2.bf16.msra.mxu0 0
      %1137 = vmatprep.subr.bf16.mxu0 0
      %1138 = vmatpush2.bf16.msra.mxu0 0
      %1139 = vmatprep.subr.bf16.mxu0 0
      %1140 = vmatpush2.bf16.msra.mxu0 0
      %1141 = vmatprep.subr.bf16.mxu0 0
      %1142 = vmatpush2.bf16.msra.mxu0 0
      %1143 = vmatprep.mubr.bf16.mxu0 0
      %1144 = vmatmul.mubr.bf16.gmra.mxu0 %v1100
      %v1145 = vpop.f32.mrf.mxu0
      %v1146 = vadd.f32 0.0, %v1145
      %v1147 = vpop.f32.mrf.mxu0
      %v1148 = vadd.f32 0.0, %v1147
      %v1149 = vpop.f32.mrf.mxu0
      %v1150 = vadd.f32 0.0, %v1149
      %v1151 = vpop.f32.mrf.mxu0
      %v1152 = vadd.f32 0.0, %v1151
      %1153 = vdwg.mxu0
      %1154 = vmatprep.subr.bf16.mxu0 0
      %1155 = vmatpush1.bf16.msra.mxu0 0
      %1156 = vmatprep.subr.bf16.mxu0 0
      %1157 = vmatpush1.bf16.msra.mxu0 0
      %1158 = vmatprep.subr.bf16.mxu0 0
      %1159 = vmatpush1.bf16.msra.mxu0 0
      %1160 = vmatprep.subr.bf16.mxu0 0
      %1161 = vmatpush1.bf16.msra.mxu0 0
      %1162 = vmatprep.subr.bf16.mxu0 0
      %1163 = vmatpush1.bf16.msra.mxu0 0
      %1164 = vmatprep.subr.bf16.mxu0 0
      %1165 = vmatpush1.bf16.msra.mxu0 0
      %1166 = vmatprep.subr.bf16.mxu0 0
      %1167 = vmatpush1.bf16.msra.mxu0 0
      %1168 = vmatprep.subr.bf16.mxu0 0
      %1169 = vmatpush1.bf16.msra.mxu0 %v1109
      %1170 = vmatprep.subr.bf16.mxu0 0
      %1171 = vmatpush2.bf16.msra.mxu0 0
      %1172 = vmatprep.subr.bf16.mxu0 0
      %1173 = vmatpush2.bf16.msra.mxu0 0
      %1174 = vmatprep.subr.bf16.mxu0 0
      %1175 = vmatpush2.bf16.msra.mxu0 0
      %1176 = vmatprep.subr.bf16.mxu0 0
      %1177 = vmatpush2.bf16.msra.mxu0 0
      %1178 = vmatprep.subr.bf16.mxu0 0
      %1179 = vmatpush2.bf16.msra.mxu0 0
      %1180 = vmatprep.subr.bf16.mxu0 0
      %1181 = vmatpush2.bf16.msra.mxu0 0
      %1182 = vmatprep.subr.bf16.mxu0 0
      %1183 = vmatpush2.bf16.msra.mxu0 0
      %1184 = vmatprep.subr.bf16.mxu0 0
      %1185 = vmatpush2.bf16.msra.mxu0 0
      %1186 = vmatprep.mubr.bf16.mxu0 0
      %1187 = vmatmul.mubr.bf16.gmra.mxu0 %v1100
      %v1188 = vpop.f32.mrf.mxu0
      %v1189 = vadd.f32 0.0, %v1188
      %v1190 = vpop.f32.mrf.mxu0
      %v1191 = vpop.f32.mrf.mxu0
      %v1192 = vadd.f32 0.0, %v1191
      %v1193 = vpop.f32.mrf.mxu0
      %1194 = vdwg.mxu0
      %v1195 = vadd.f32 %v1058, %v1146
      %v1196 = vadd.f32 %v1059, %v1148
      %v1197 = vadd.f32 %v1060, %v1189
      %v1198 = vadd.f32 %v1061, %v1150
      %v1199 = vadd.f32 %v1062, %v1152
      %v1200 = vadd.f32 %v1063, %v1192
      %v1201 = vld [vmem:[%s273] sm:$0x3f]
      %s1202 = scalar_lea.vmem %s1, 56
      %v1203 = vld [vmem:[%s1202] sm:$0xf]
      %v1204 = vld [vmem:[%s1202 + $0x4] sm:$0xf]
      %v1207 = vunpack.c.l.b16 %v1203
      %v1208 = vunpack.c.l.b16 %v1204
      %v1209 = vpack.c.b16 %v1208, %v1207
      %v1211 = vcombine.high %v1201, %v1201
      %v1213 = vunpack.c.l.s4 1983009808
      %v1214 = vunpack.c.0.s8 %v1213
      %v1215 = vlaneseq
      %v1216 = vshrl.u32 %v1215, 7
      %v1217 = vsub.s32 %v1214, %v1216
      %v1218 = vrot.slane %v1201, %v1217
      %v1220 = vunpack.c.l.s4 1983009808
      %v1221 = vunpack.c.0.s8 %v1220
      %v1222 = vlaneseq
      %v1223 = vshrl.u32 %v1222, 7
      %v1224 = vsub.s32 %v1221, %v1223
      %v1225 = vrot.slane %v1211, %v1224
      %v1226 = vcombine.high %v1218, %v1218
      %1227 = vrot.lane.b32.xlu0 %v1218, 93
      %v1228 = vpop.permute.xlu0 %1227
      %1229 = vrot.lane.b32.xlu0 %v1226, 93
      %v1230 = vpop.permute.xlu0 %1229
      %1231 = vrot.lane.b32.xlu0 %v1225, 93
      %v1232 = vpop.permute.xlu0 %1231
      %vm1233 = vcmask 760832
      %v1234 = vsel %vm1233, %v1228, %v1230
      %v1235 = vsel %vm1233, %v1230, %v1232
      %v1237 = vsel %vm317, %v1209, 0
      %v1240 = vsel %vm321, %v1234, 0
      %v1243 = vsel %vm321, %v1235, 0
      %v1246 = vsel %vm321, %v1232, 0
      %1248 = vmatprep.subr.bf16.mxu0 0
      %1249 = vmatpush1.bf16.msra.mxu0 0
      %1250 = vmatprep.subr.bf16.mxu0 0
      %1251 = vmatpush1.bf16.msra.mxu0 0
      %1252 = vmatprep.subr.bf16.mxu0 0
      %1253 = vmatpush1.bf16.msra.mxu0 0
      %1254 = vmatprep.subr.bf16.mxu0 0
      %1255 = vmatpush1.bf16.msra.mxu0 0
      %1256 = vmatprep.subr.bf16.mxu0 0
      %1257 = vmatpush1.bf16.msra.mxu0 0
      %1258 = vmatprep.subr.bf16.mxu0 0
      %1259 = vmatpush1.bf16.msra.mxu0 0
      %1260 = vmatprep.subr.bf16.mxu0 0
      %1261 = vmatpush1.bf16.msra.mxu0 0
      %1262 = vmatprep.subr.bf16.mxu0 %v1243
      %1263 = vmatpush1.bf16.msra.mxu0 %v1240
      %1264 = vmatprep.subr.bf16.mxu0 0
      %1265 = vmatpush2.bf16.msra.mxu0 0
      %1266 = vmatprep.subr.bf16.mxu0 0
      %1267 = vmatpush2.bf16.msra.mxu0 0
      %1268 = vmatprep.subr.bf16.mxu0 0
      %1269 = vmatpush2.bf16.msra.mxu0 0
      %1270 = vmatprep.subr.bf16.mxu0 0
      %1271 = vmatpush2.bf16.msra.mxu0 0
      %1272 = vmatprep.subr.bf16.mxu0 0
      %1273 = vmatpush2.bf16.msra.mxu0 0
      %1274 = vmatprep.subr.bf16.mxu0 0
      %1275 = vmatpush2.bf16.msra.mxu0 0
      %1276 = vmatprep.subr.bf16.mxu0 0
      %1277 = vmatpush2.bf16.msra.mxu0 0
      %1278 = vmatprep.subr.bf16.mxu0 0
      %1279 = vmatpush2.bf16.msra.mxu0 0
      %1280 = vmatprep.mubr.bf16.mxu0 0
      %1281 = vmatmul.mubr.bf16.gmra.mxu0 %v1237
      %v1282 = vpop.f32.mrf.mxu0
      %v1283 = vadd.f32 0.0, %v1282
      %v1284 = vpop.f32.mrf.mxu0
      %v1285 = vadd.f32 0.0, %v1284
      %v1286 = vpop.f32.mrf.mxu0
      %v1287 = vadd.f32 0.0, %v1286
      %v1288 = vpop.f32.mrf.mxu0
      %v1289 = vadd.f32 0.0, %v1288
      %1290 = vdwg.mxu0
      %1291 = vmatprep.subr.bf16.mxu0 0
      %1292 = vmatpush1.bf16.msra.mxu0 0
      %1293 = vmatprep.subr.bf16.mxu0 0
      %1294 = vmatpush1.bf16.msra.mxu0 0
      %1295 = vmatprep.subr.bf16.mxu0 0
      %1296 = vmatpush1.bf16.msra.mxu0 0
      %1297 = vmatprep.subr.bf16.mxu0 0
      %1298 = vmatpush1.bf16.msra.mxu0 0
      %1299 = vmatprep.subr.bf16.mxu0 0
      %1300 = vmatpush1.bf16.msra.mxu0 0
      %1301 = vmatprep.subr.bf16.mxu0 0
      %1302 = vmatpush1.bf16.msra.mxu0 0
      %1303 = vmatprep.subr.bf16.mxu0 0
      %1304 = vmatpush1.bf16.msra.mxu0 0
      %1305 = vmatprep.subr.bf16.mxu0 0
      %1306 = vmatpush1.bf16.msra.mxu0 %v1246
      %1307 = vmatprep.subr.bf16.mxu0 0
      %1308 = vmatpush2.bf16.msra.mxu0 0
      %1309 = vmatprep.subr.bf16.mxu0 0
      %1310 = vmatpush2.bf16.msra.mxu0 0
      %1311 = vmatprep.subr.bf16.mxu0 0
      %1312 = vmatpush2.bf16.msra.mxu0 0
      %1313 = vmatprep.subr.bf16.mxu0 0
      %1314 = vmatpush2.bf16.msra.mxu0 0
      %1315 = vmatprep.subr.bf16.mxu0 0
      %1316 = vmatpush2.bf16.msra.mxu0 0
      %1317 = vmatprep.subr.bf16.mxu0 0
      %1318 = vmatpush2.bf16.msra.mxu0 0
      %1319 = vmatprep.subr.bf16.mxu0 0
      %1320 = vmatpush2.bf16.msra.mxu0 0
      %1321 = vmatprep.subr.bf16.mxu0 0
      %1322 = vmatpush2.bf16.msra.mxu0 0
      %1323 = vmatprep.mubr.bf16.mxu0 0
      %1324 = vmatmul.mubr.bf16.gmra.mxu0 %v1237
      %v1325 = vpop.f32.mrf.mxu0
      %v1326 = vadd.f32 0.0, %v1325
      %v1327 = vpop.f32.mrf.mxu0
      %v1328 = vpop.f32.mrf.mxu0
      %v1329 = vadd.f32 0.0, %v1328
      %v1330 = vpop.f32.mrf.mxu0
      %1331 = vdwg.mxu0
      %v1332 = vadd.f32 %v1195, %v1283
      %v1333 = vadd.f32 %v1196, %v1285
      %v1334 = vadd.f32 %v1197, %v1326
      %v1335 = vadd.f32 %v1198, %v1287
      %v1336 = vadd.f32 %v1199, %v1289
      %v1337 = vadd.f32 %v1200, %v1329
      %v1338 = vld [vmem:[%s273] sm:$0x3f]
      %s1339 = scalar_lea.vmem %s1, 64
      %v1340 = vld [vmem:[%s1339] sm:$0xf]
      %v1341 = vld [vmem:[%s1339 + $0x4] sm:$0xf]
      %v1344 = vunpack.c.l.b16 %v1340
      %v1345 = vunpack.c.l.b16 %v1341
      %v1346 = vpack.c.b16 %v1345, %v1344
      %v1348 = vcombine.high %v1338, %v1338
      %v1350 = vunpack.c.l.s4 1983009808
      %v1351 = vunpack.c.0.s8 %v1350
      %v1352 = vlaneseq
      %v1353 = vshrl.u32 %v1352, 7
      %v1354 = vsub.s32 %v1351, %v1353
      %v1355 = vrot.slane %v1338, %v1354
      %v1357 = vunpack.c.l.s4 1983009808
      %v1358 = vunpack.c.0.s8 %v1357
      %v1359 = vlaneseq
      %v1360 = vshrl.u32 %v1359, 7
      %v1361 = vsub.s32 %v1358, %v1360
      %v1362 = vrot.slane %v1348, %v1361
      %v1363 = vcombine.high %v1355, %v1355
      %1364 = vrot.lane.b32.xlu0 %v1355, 92
      %v1365 = vpop.permute.xlu0 %1364
      %1366 = vrot.lane.b32.xlu0 %v1363, 92
      %v1367 = vpop.permute.xlu0 %1366
      %1368 = vrot.lane.b32.xlu0 %v1362, 92
      %v1369 = vpop.permute.xlu0 %1368
      %vm1370 = vcmask 752640
      %v1371 = vsel %vm1370, %v1365, %v1367
      %v1372 = vsel %vm1370, %v1367, %v1369
      %v1374 = vsel %vm317, %v1346, 0
      %v1377 = vsel %vm321, %v1371, 0
      %v1380 = vsel %vm321, %v1372, 0
      %v1383 = vsel %vm321, %v1369, 0
      %1385 = vmatprep.subr.bf16.mxu0 0
      %1386 = vmatpush1.bf16.msra.mxu0 0
      %1387 = vmatprep.subr.bf16.mxu0 0
      %1388 = vmatpush1.bf16.msra.mxu0 0
      %1389 = vmatprep.subr.bf16.mxu0 0
      %1390 = vmatpush1.bf16.msra.mxu0 0
      %1391 = vmatprep.subr.bf16.mxu0 0
      %1392 = vmatpush1.bf16.msra.mxu0 0
      %1393 = vmatprep.subr.bf16.mxu0 0
      %1394 = vmatpush1.bf16.msra.mxu0 0
      %1395 = vmatprep.subr.bf16.mxu0 0
      %1396 = vmatpush1.bf16.msra.mxu0 0
      %1397 = vmatprep.subr.bf16.mxu0 0
      %1398 = vmatpush1.bf16.msra.mxu0 0
      %1399 = vmatprep.subr.bf16.mxu0 %v1380
      %1400 = vmatpush1.bf16.msra.mxu0 %v1377
      %1401 = vmatprep.subr.bf16.mxu0 0
      %1402 = vmatpush2.bf16.msra.mxu0 0
      %1403 = vmatprep.subr.bf16.mxu0 0
      %1404 = vmatpush2.bf16.msra.mxu0 0
      %1405 = vmatprep.subr.bf16.mxu0 0
      %1406 = vmatpush2.bf16.msra.mxu0 0
      %1407 = vmatprep.subr.bf16.mxu0 0
      %1408 = vmatpush2.bf16.msra.mxu0 0
      %1409 = vmatprep.subr.bf16.mxu0 0
      %1410 = vmatpush2.bf16.msra.mxu0 0
      %1411 = vmatprep.subr.bf16.mxu0 0
      %1412 = vmatpush2.bf16.msra.mxu0 0
      %1413 = vmatprep.subr.bf16.mxu0 0
      %1414 = vmatpush2.bf16.msra.mxu0 0
      %1415 = vmatprep.subr.bf16.mxu0 0
      %1416 = vmatpush2.bf16.msra.mxu0 0
      %1417 = vmatprep.mubr.bf16.mxu0 0
      %1418 = vmatmul.mubr.bf16.gmra.mxu0 %v1374
      %v1419 = vpop.f32.mrf.mxu0
      %v1420 = vadd.f32 0.0, %v1419
      %v1421 = vpop.f32.mrf.mxu0
      %v1422 = vadd.f32 0.0, %v1421
      %v1423 = vpop.f32.mrf.mxu0
      %v1424 = vadd.f32 0.0, %v1423
      %v1425 = vpop.f32.mrf.mxu0
      %v1426 = vadd.f32 0.0, %v1425
      %1427 = vdwg.mxu0
      %1428 = vmatprep.subr.bf16.mxu0 0
      %1429 = vmatpush1.bf16.msra.mxu0 0
      %1430 = vmatprep.subr.bf16.mxu0 0
      %1431 = vmatpush1.bf16.msra.mxu0 0
      %1432 = vmatprep.subr.bf16.mxu0 0
      %1433 = vmatpush1.bf16.msra.mxu0 0
      %1434 = vmatprep.subr.bf16.mxu0 0
      %1435 = vmatpush1.bf16.msra.mxu0 0
      %1436 = vmatprep.subr.bf16.mxu0 0
      %1437 = vmatpush1.bf16.msra.mxu0 0
      %1438 = vmatprep.subr.bf16.mxu0 0
      %1439 = vmatpush1.bf16.msra.mxu0 0
      %1440 = vmatprep.subr.bf16.mxu0 0
      %1441 = vmatpush1.bf16.msra.mxu0 0
      %1442 = vmatprep.subr.bf16.mxu0 0
      %1443 = vmatpush1.bf16.msra.mxu0 %v1383
      %1444 = vmatprep.subr.bf16.mxu0 0
      %1445 = vmatpush2.bf16.msra.mxu0 0
      %1446 = vmatprep.subr.bf16.mxu0 0
      %1447 = vmatpush2.bf16.msra.mxu0 0
      %1448 = vmatprep.subr.bf16.mxu0 0
      %1449 = vmatpush2.bf16.msra.mxu0 0
      %1450 = vmatprep.subr.bf16.mxu0 0
      %1451 = vmatpush2.bf16.msra.mxu0 0
      %1452 = vmatprep.subr.bf16.mxu0 0
      %1453 = vmatpush2.bf16.msra.mxu0 0
      %1454 = vmatprep.subr.bf16.mxu0 0
      %1455 = vmatpush2.bf16.msra.mxu0 0
      %1456 = vmatprep.subr.bf16.mxu0 0
      %1457 = vmatpush2.bf16.msra.mxu0 0
      %1458 = vmatprep.subr.bf16.mxu0 0
      %1459 = vmatpush2.bf16.msra.mxu0 0
      %1460 = vmatprep.mubr.bf16.mxu0 0
      %1461 = vmatmul.mubr.bf16.gmra.mxu0 %v1374
      %v1462 = vpop.f32.mrf.mxu0
      %v1463 = vadd.f32 0.0, %v1462
      %v1464 = vpop.f32.mrf.mxu0
      %v1465 = vpop.f32.mrf.mxu0
      %v1466 = vadd.f32 0.0, %v1465
      %v1467 = vpop.f32.mrf.mxu0
      %1468 = vdwg.mxu0
      %v1469 = vadd.f32 %v1332, %v1420
      %v1470 = vadd.f32 %v1333, %v1422
      %v1471 = vadd.f32 %v1334, %v1463
      %v1472 = vadd.f32 %v1335, %v1424
      %v1473 = vadd.f32 %v1336, %v1426
      %v1474 = vadd.f32 %v1337, %v1466
      %v1475 = vld [vmem:[%s3] sm:$0xff]
      %v1476 = vld [vmem:[%s3 + $0x8] sm:$0xff]
      %1478 = vset.pattern.permute.xlu0 0
      %1479 = vperm.xlu0 %1478, %v1475
      %v1480 = vpop.permute.xlu0 %1479
      %1483 = vset.pattern.permute.xlu0 0
      %1484 = vperm.xlu0 %1483, %v1476
      %v1485 = vpop.permute.xlu0 %1484
      %v1487 = vadd.f32 %v1469, %v1480
      %v1488 = vadd.f32 %v1470, %v1480
      %v1489 = vadd.f32 %v1471, %v1480
      %v1490 = vadd.f32 %v1472, %v1485
      %v1491 = vadd.f32 %v1473, %v1485
      %v1492 = vadd.f32 %v1474, %v1485
      %vm1493 = vcmp.ge.f32.partialorder %v1487, 0.0
      %vm1494 = vcmp.ge.f32.partialorder %v1488, 0.0
      %vm1495 = vcmp.ge.f32.partialorder %v1489, 0.0
      %vm1496 = vcmp.ge.f32.partialorder %v1490, 0.0
      %vm1497 = vcmp.ge.f32.partialorder %v1491, 0.0
      %vm1498 = vcmp.ge.f32.partialorder %v1492, 0.0
      %v1499 = vmul.f32 %v1487, 0.01
      %v1500 = vmul.f32 %v1488, 0.01
      %v1501 = vmul.f32 %v1489, 0.01
      %v1502 = vmul.f32 %v1490, 0.01
      %v1503 = vmul.f32 %v1491, 0.01
      %v1504 = vmul.f32 %v1492, 0.01
      %v1505 = vsel %vm1493, %v1487, %v1499
      %v1506 = vsel %vm1494, %v1488, %v1500
      %v1507 = vsel %vm1495, %v1489, %v1501
      %v1508 = vsel %vm1496, %v1490, %v1502
      %v1509 = vsel %vm1497, %v1491, %v1503
      %v1510 = vsel %vm1498, %v1492, %v1504
      %v1511 = vld [vmem:[%s6] sm:$0x7]
      %v1513 = vlaneseq
      %v1514 = vshrl.u32 %v1513, 7
      %v1515 = vsub.s32 0, %v1514
      %v1516 = vrot.slane %v1511, %v1515
      %v1517 = vlaneseq
      %v1518 = vshrl.u32 %v1517, 7
      %v1519 = vsub.s32 1, %v1518
      %v1520 = vrot.slane %v1511, %v1519
      %v1521 = vlaneseq
      %v1522 = vshrl.u32 %v1521, 7
      %v1523 = vsub.s32 2, %v1522
      %v1524 = vrot.slane %v1511, %v1523
      %v1528 = vmul.f32 %v1505, %v1516
      %v1529 = vmul.f32 %v1506, %v1520
      %v1530 = vmul.f32 %v1507, %v1524
      %v1531 = vmul.f32 %v1508, %v1516
      %v1532 = vmul.f32 %v1509, %v1520
      %v1533 = vmul.f32 %v1510, %v1524
      %1534 = vst [vmem:[#allocation2] sm:$0xff] 0
      %vm1535 = vcmask 420864
      %1536 = vst.msk [vmem:[#allocation2 + $0x8] sm:$0xf] %vm1535, 0
      %1537 = vst [vmem:[#allocation2 + $0xc] sm:$0xff] 0
      %1538 = vst.msk [vmem:[#allocation2 + $0x14] sm:$0xf] %vm1535, 0
      %v1539 = vpack.c.bf16 %v1531, %v1528
      %v1540 = vpack.c.bf16 %v1532, %v1529
      %v1541 = vpack.c.bf16 %v1533, %v1530
      %v1545 = vunpack.c.l.b16 %v1539
      %v1546 = vunpack.c.l.b16 %v1540
      %v1547 = vunpack.c.l.b16 %v1541
      %v1548 = vunpack.c.h.b16 %v1539
      %v1549 = vunpack.c.h.b16 %v1540
      %v1550 = vunpack.c.h.b16 %v1541
      %v1551 = vpack.c.b16 %v1546, %v1545
      %v1552 = vpack.c.b16 %v1547, %v1547
      %v1553 = vpack.c.b16 %v1549, %v1548
      %v1554 = vpack.c.b16 %v1550, %v1550
      %1555 = vrot.lane.b32.xlu0 %v1551, 18
      %v1556 = vpop.permute.xlu0 %1555
      %1557 = vrot.lane.b32.xlu0 %v1552, 18
      %v1558 = vpop.permute.xlu0 %1557
      %1559 = vrot.lane.b32.xlu0 %v1553, 18
      %v1560 = vpop.permute.xlu0 %1559
      %1561 = vrot.lane.b32.xlu0 %v1554, 18
      %v1562 = vpop.permute.xlu0 %1561
      %v1563 = vrot.slane %v1556, 4
      %v1564 = vrot.slane %v1560, 4
      %vm1565 = vcmask 146432
      %v1566 = vsel %vm1565, %v1563, %v1556
      %v1567 = vsel %vm1565, %v1563, %v1558
      %v1568 = vsel %vm1565, %v1564, %v1560
      %v1569 = vsel %vm1565, %v1564, %v1562
      %vm1574 = vcmask 1043600
      %vm1575 = vcmask 1047556
      %vm1576 = vmor %vm1575, %vm1574
      %1577 = vst.msk [vmem:[#allocation2] sm:$0xff] %vm1576, %v1566
      %vm1578 = vcmask 273408
      %1579 = vst.msk [vmem:[#allocation2 + $0x8] sm:$0xf] %vm1578, %v1567
      %1580 = vst.msk [vmem:[#allocation2 + $0xc] sm:$0xff] %vm1576, %v1568
      %1581 = vst.msk [vmem:[#allocation2 + $0x14] sm:$0xf] %vm1578, %v1569
      %v1582 = vld [vmem:[#allocation2] sm:$0xff]
      %v1583 = vld [vmem:[#allocation2 + $0x8] sm:$0xf]
      %v1584 = vld [vmem:[#allocation2 + $0xc] sm:$0xff]
      %v1585 = vld [vmem:[#allocation2 + $0x14] sm:$0xf]
      %v1586 = vld [vmem:[%s2] sm:$0xf]
      %v1587 = vld [vmem:[%s2 + $0x4] sm:$0xf]
      %s1588 = scalar_lea.vmem %s2, 8
      %v1589 = vld [vmem:[%s1588] sm:$0xf]
      %v1590 = vld [vmem:[%s1588 + $0x4] sm:$0xf]
      %v1593 = vunpack.c.l.b16 %v1589
      %v1594 = vunpack.c.l.b16 %v1590
      %v1595 = vpack.c.b16 %v1594, %v1593
      %v1600 = vunpack.c.l.b16 %v1582
      %v1601 = vunpack.c.h.b16 %v1582
      %v1602 = vunpack.c.l.b16 %v1583
      %v1603 = vunpack.c.l.b16 %v1584
      %v1604 = vunpack.c.h.b16 %v1584
      %v1605 = vunpack.c.l.b16 %v1585
      %v1606 = vpack.c.b16 %v1603, %v1600
      %v1607 = vpack.c.b16 %v1604, %v1601
      %v1608 = vpack.c.b16 %v1605, %v1602
      %1609 = vrot.lane.b32.xlu0 %v1606, 127
      %v1610 = vpop.permute.xlu0 %1609
      %1611 = vrot.lane.b32.xlu0 %v1607, 127
      %v1612 = vpop.permute.xlu0 %1611
      %1613 = vrot.lane.b32.xlu0 %v1608, 127
      %v1614 = vpop.permute.xlu0 %1613
      %v1615 = vsel %vm314, %v1610, %v1612
      %v1616 = vsel %vm314, %v1612, %v1614
      %vm1620 = vcmask 130048
      %v1622 = vsel %vm1620, %v1595, 0
      %1624 = vmatprep.subr.bf16.mxu0 0
      %1625 = vmatpush1.bf16.msra.mxu0 0
      %1626 = vmatprep.subr.bf16.mxu0 0
      %1627 = vmatpush1.bf16.msra.mxu0 0
      %1628 = vmatprep.subr.bf16.mxu0 0
      %1629 = vmatpush1.bf16.msra.mxu0 0
      %1630 = vmatprep.subr.bf16.mxu0 0
      %1631 = vmatpush1.bf16.msra.mxu0 0
      %1632 = vmatprep.subr.bf16.mxu0 0
      %1633 = vmatpush1.bf16.msra.mxu0 0
      %1634 = vmatprep.subr.bf16.mxu0 0
      %1635 = vmatpush1.bf16.msra.mxu0 0
      %1636 = vmatprep.subr.bf16.mxu0 0
      %1637 = vmatpush1.bf16.msra.mxu0 0
      %1638 = vmatprep.subr.bf16.mxu0 %v1616
      %1639 = vmatpush1.bf16.msra.mxu0 %v1615
      %1640 = vmatprep.subr.bf16.mxu0 0
      %1641 = vmatpush2.bf16.msra.mxu0 0
      %1642 = vmatprep.subr.bf16.mxu0 0
      %1643 = vmatpush2.bf16.msra.mxu0 0
      %1644 = vmatprep.subr.bf16.mxu0 0
      %1645 = vmatpush2.bf16.msra.mxu0 0
      %1646 = vmatprep.subr.bf16.mxu0 0
      %1647 = vmatpush2.bf16.msra.mxu0 0
      %1648 = vmatprep.subr.bf16.mxu0 0
      %1649 = vmatpush2.bf16.msra.mxu0 0
      %1650 = vmatprep.subr.bf16.mxu0 0
      %1651 = vmatpush2.bf16.msra.mxu0 0
      %1652 = vmatprep.subr.bf16.mxu0 0
      %1653 = vmatpush2.bf16.msra.mxu0 0
      %1654 = vmatprep.subr.bf16.mxu0 0
      %1655 = vmatpush2.bf16.msra.mxu0 0
      %1656 = vmatprep.mubr.bf16.mxu0 0
      %1657 = vmatmul.mubr.bf16.gmra.mxu0 %v1622
      %v1658 = vpop.f32.mrf.mxu0
      %v1659 = vadd.f32 0.0, %v1658
      %v1660 = vpop.f32.mrf.mxu0
      %v1661 = vadd.f32 0.0, %v1660
      %v1662 = vpop.f32.mrf.mxu0
      %v1663 = vadd.f32 0.0, %v1662
      %v1664 = vpop.f32.mrf.mxu0
      %v1665 = vadd.f32 0.0, %v1664
      %1666 = vdwg.mxu0
      %1667 = vmatprep.subr.bf16.mxu0 0
      %1668 = vmatpush1.bf16.msra.mxu0 0
      %1669 = vmatprep.subr.bf16.mxu0 0
      %1670 = vmatpush1.bf16.msra.mxu0 0
      %1671 = vmatprep.subr.bf16.mxu0 0
      %1672 = vmatpush1.bf16.msra.mxu0 0
      %1673 = vmatprep.subr.bf16.mxu0 0
      %1674 = vmatpush1.bf16.msra.mxu0 0
      %1675 = vmatprep.subr.bf16.mxu0 0
      %1676 = vmatpush1.bf16.msra.mxu0 0
      %1677 = vmatprep.subr.bf16.mxu0 0
      %1678 = vmatpush1.bf16.msra.mxu0 0
      %1679 = vmatprep.subr.bf16.mxu0 0
      %1680 = vmatpush1.bf16.msra.mxu0 0
      %1681 = vmatprep.subr.bf16.mxu0 0
      %1682 = vmatpush1.bf16.msra.mxu0 %v1614
      %1683 = vmatprep.subr.bf16.mxu0 0
      %1684 = vmatpush2.bf16.msra.mxu0 0
      %1685 = vmatprep.subr.bf16.mxu0 0
      %1686 = vmatpush2.bf16.msra.mxu0 0
      %1687 = vmatprep.subr.bf16.mxu0 0
      %1688 = vmatpush2.bf16.msra.mxu0 0
      %1689 = vmatprep.subr.bf16.mxu0 0
      %1690 = vmatpush2.bf16.msra.mxu0 0
      %1691 = vmatprep.subr.bf16.mxu0 0
      %1692 = vmatpush2.bf16.msra.mxu0 0
      %1693 = vmatprep.subr.bf16.mxu0 0
      %1694 = vmatpush2.bf16.msra.mxu0 0
      %1695 = vmatprep.subr.bf16.mxu0 0
      %1696 = vmatpush2.bf16.msra.mxu0 0
      %1697 = vmatprep.subr.bf16.mxu0 0
      %1698 = vmatpush2.bf16.msra.mxu0 0
      %1699 = vmatprep.mubr.bf16.mxu0 0
      %1700 = vmatmul.mubr.bf16.gmra.mxu0 %v1622
      %v1701 = vpop.f32.mrf.mxu0
      %v1702 = vadd.f32 0.0, %v1701
      %v1703 = vpop.f32.mrf.mxu0
      %v1704 = vpop.f32.mrf.mxu0
      %v1705 = vadd.f32 0.0, %v1704
      %v1706 = vpop.f32.mrf.mxu0
      %1707 = vdwg.mxu0
      %v1710 = vunpack.c.l.b16 %v1586
      %v1711 = vunpack.c.l.b16 %v1587
      %v1712 = vpack.c.b16 %v1711, %v1710
      %v1717 = vsel %vm1620, %v1712, 0
      %1719 = vmatprep.subr.bf16.mxu0 0
      %1720 = vmatpush1.bf16.msra.mxu0 0
      %1721 = vmatprep.subr.bf16.mxu0 0
      %1722 = vmatpush1.bf16.msra.mxu0 0
      %1723 = vmatprep.subr.bf16.mxu0 0
      %1724 = vmatpush1.bf16.msra.mxu0 0
      %1725 = vmatprep.subr.bf16.mxu0 0
      %1726 = vmatpush1.bf16.msra.mxu0 0
      %1727 = vmatprep.subr.bf16.mxu0 0
      %1728 = vmatpush1.bf16.msra.mxu0 0
      %1729 = vmatprep.subr.bf16.mxu0 0
      %1730 = vmatpush1.bf16.msra.mxu0 0
      %1731 = vmatprep.subr.bf16.mxu0 0
      %1732 = vmatpush1.bf16.msra.mxu0 0
      %1733 = vmatprep.subr.bf16.mxu0 %v1607
      %1734 = vmatpush1.bf16.msra.mxu0 %v1606
      %1735 = vmatprep.subr.bf16.mxu0 0
      %1736 = vmatpush2.bf16.msra.mxu0 0
      %1737 = vmatprep.subr.bf16.mxu0 0
      %1738 = vmatpush2.bf16.msra.mxu0 0
      %1739 = vmatprep.subr.bf16.mxu0 0
      %1740 = vmatpush2.bf16.msra.mxu0 0
      %1741 = vmatprep.subr.bf16.mxu0 0
      %1742 = vmatpush2.bf16.msra.mxu0 0
      %1743 = vmatprep.subr.bf16.mxu0 0
      %1744 = vmatpush2.bf16.msra.mxu0 0
      %1745 = vmatprep.subr.bf16.mxu0 0
      %1746 = vmatpush2.bf16.msra.mxu0 0
      %1747 = vmatprep.subr.bf16.mxu0 0
      %1748 = vmatpush2.bf16.msra.mxu0 0
      %1749 = vmatprep.subr.bf16.mxu0 0
      %1750 = vmatpush2.bf16.msra.mxu0 0
      %1751 = vmatprep.mubr.bf16.mxu0 0
      %1752 = vmatmul.mubr.bf16.gmra.mxu0 %v1717
      %v1753 = vpop.f32.mrf.mxu0
      %v1754 = vadd.f32 %v1659, %v1753
      %v1755 = vpop.f32.mrf.mxu0
      %v1756 = vadd.f32 %v1661, %v1755
      %v1757 = vpop.f32.mrf.mxu0
      %v1758 = vadd.f32 %v1663, %v1757
      %v1759 = vpop.f32.mrf.mxu0
      %v1760 = vadd.f32 %v1665, %v1759
      %1761 = vdwg.mxu0
      %1762 = vmatprep.subr.bf16.mxu0 0
      %1763 = vmatpush1.bf16.msra.mxu0 0
      %1764 = vmatprep.subr.bf16.mxu0 0
      %1765 = vmatpush1.bf16.msra.mxu0 0
      %1766 = vmatprep.subr.bf16.mxu0 0
      %1767 = vmatpush1.bf16.msra.mxu0 0
      %1768 = vmatprep.subr.bf16.mxu0 0
      %1769 = vmatpush1.bf16.msra.mxu0 0
      %1770 = vmatprep.subr.bf16.mxu0 0
      %1771 = vmatpush1.bf16.msra.mxu0 0
      %1772 = vmatprep.subr.bf16.mxu0 0
      %1773 = vmatpush1.bf16.msra.mxu0 0
      %1774 = vmatprep.subr.bf16.mxu0 0
      %1775 = vmatpush1.bf16.msra.mxu0 0
      %1776 = vmatprep.subr.bf16.mxu0 0
      %1777 = vmatpush1.bf16.msra.mxu0 %v1608
      %1778 = vmatprep.subr.bf16.mxu0 0
      %1779 = vmatpush2.bf16.msra.mxu0 0
      %1780 = vmatprep.subr.bf16.mxu0 0
      %1781 = vmatpush2.bf16.msra.mxu0 0
      %1782 = vmatprep.subr.bf16.mxu0 0
      %1783 = vmatpush2.bf16.msra.mxu0 0
      %1784 = vmatprep.subr.bf16.mxu0 0
      %1785 = vmatpush2.bf16.msra.mxu0 0
      %1786 = vmatprep.subr.bf16.mxu0 0
      %1787 = vmatpush2.bf16.msra.mxu0 0
      %1788 = vmatprep.subr.bf16.mxu0 0
      %1789 = vmatpush2.bf16.msra.mxu0 0
      %1790 = vmatprep.subr.bf16.mxu0 0
      %1791 = vmatpush2.bf16.msra.mxu0 0
      %1792 = vmatprep.subr.bf16.mxu0 0
      %1793 = vmatpush2.bf16.msra.mxu0 0
      %1794 = vmatprep.mubr.bf16.mxu0 0
      %1795 = vmatmul.mubr.bf16.gmra.mxu0 %v1717
      %v1796 = vpop.f32.mrf.mxu0
      %v1797 = vadd.f32 %v1702, %v1796
      %v1798 = vpop.f32.mrf.mxu0
      %v1799 = vpop.f32.mrf.mxu0
      %v1800 = vadd.f32 %v1705, %v1799
      %v1801 = vpop.f32.mrf.mxu0
      %1802 = vdwg.mxu0
      %s1803 = scalar_lea.vmem %s2, 16
      %v1804 = vld [vmem:[%s1803] sm:$0xf]
      %v1805 = vld [vmem:[%s1803 + $0x4] sm:$0xf]
      %v1808 = vunpack.c.l.b16 %v1804
      %v1809 = vunpack.c.l.b16 %v1805
      %v1810 = vpack.c.b16 %v1809, %v1808
      %1811 = vrot.lane.b32.xlu0 %v1606, 126
      %v1812 = vpop.permute.xlu0 %1811
      %1813 = vrot.lane.b32.xlu0 %v1607, 126
      %v1814 = vpop.permute.xlu0 %1813
      %1815 = vrot.lane.b32.xlu0 %v1608, 126
      %v1816 = vpop.permute.xlu0 %1815
      %v1817 = vsel %vm548, %v1812, %v1814
      %v1818 = vsel %vm548, %v1814, %v1816
      %v1823 = vsel %vm1620, %v1810, 0
      %1825 = vmatprep.subr.bf16.mxu0 0
      %1826 = vmatpush1.bf16.msra.mxu0 0
      %1827 = vmatprep.subr.bf16.mxu0 0
      %1828 = vmatpush1.bf16.msra.mxu0 0
      %1829 = vmatprep.subr.bf16.mxu0 0
      %1830 = vmatpush1.bf16.msra.mxu0 0
      %1831 = vmatprep.subr.bf16.mxu0 0
      %1832 = vmatpush1.bf16.msra.mxu0 0
      %1833 = vmatprep.subr.bf16.mxu0 0
      %1834 = vmatpush1.bf16.msra.mxu0 0
      %1835 = vmatprep.subr.bf16.mxu0 0
      %1836 = vmatpush1.bf16.msra.mxu0 0
      %1837 = vmatprep.subr.bf16.mxu0 0
      %1838 = vmatpush1.bf16.msra.mxu0 0
      %1839 = vmatprep.subr.bf16.mxu0 %v1818
      %1840 = vmatpush1.bf16.msra.mxu0 %v1817
      %1841 = vmatprep.subr.bf16.mxu0 0
      %1842 = vmatpush2.bf16.msra.mxu0 0
      %1843 = vmatprep.subr.bf16.mxu0 0
      %1844 = vmatpush2.bf16.msra.mxu0 0
      %1845 = vmatprep.subr.bf16.mxu0 0
      %1846 = vmatpush2.bf16.msra.mxu0 0
      %1847 = vmatprep.subr.bf16.mxu0 0
      %1848 = vmatpush2.bf16.msra.mxu0 0
      %1849 = vmatprep.subr.bf16.mxu0 0
      %1850 = vmatpush2.bf16.msra.mxu0 0
      %1851 = vmatprep.subr.bf16.mxu0 0
      %1852 = vmatpush2.bf16.msra.mxu0 0
      %1853 = vmatprep.subr.bf16.mxu0 0
      %1854 = vmatpush2.bf16.msra.mxu0 0
      %1855 = vmatprep.subr.bf16.mxu0 0
      %1856 = vmatpush2.bf16.msra.mxu0 0
      %1857 = vmatprep.mubr.bf16.mxu0 0
      %1858 = vmatmul.mubr.bf16.gmra.mxu0 %v1823
      %v1859 = vpop.f32.mrf.mxu0
      %v1860 = vadd.f32 0.0, %v1859
      %v1861 = vpop.f32.mrf.mxu0
      %v1862 = vadd.f32 0.0, %v1861
      %v1863 = vpop.f32.mrf.mxu0
      %v1864 = vadd.f32 0.0, %v1863
      %v1865 = vpop.f32.mrf.mxu0
      %v1866 = vadd.f32 0.0, %v1865
      %1867 = vdwg.mxu0
      %1868 = vmatprep.subr.bf16.mxu0 0
      %1869 = vmatpush1.bf16.msra.mxu0 0
      %1870 = vmatprep.subr.bf16.mxu0 0
      %1871 = vmatpush1.bf16.msra.mxu0 0
      %1872 = vmatprep.subr.bf16.mxu0 0
      %1873 = vmatpush1.bf16.msra.mxu0 0
      %1874 = vmatprep.subr.bf16.mxu0 0
      %1875 = vmatpush1.bf16.msra.mxu0 0
      %1876 = vmatprep.subr.bf16.mxu0 0
      %1877 = vmatpush1.bf16.msra.mxu0 0
      %1878 = vmatprep.subr.bf16.mxu0 0
      %1879 = vmatpush1.bf16.msra.mxu0 0
      %1880 = vmatprep.subr.bf16.mxu0 0
      %1881 = vmatpush1.bf16.msra.mxu0 0
      %1882 = vmatprep.subr.bf16.mxu0 0
      %1883 = vmatpush1.bf16.msra.mxu0 %v1816
      %1884 = vmatprep.subr.bf16.mxu0 0
      %1885 = vmatpush2.bf16.msra.mxu0 0
      %1886 = vmatprep.subr.bf16.mxu0 0
      %1887 = vmatpush2.bf16.msra.mxu0 0
      %1888 = vmatprep.subr.bf16.mxu0 0
      %1889 = vmatpush2.bf16.msra.mxu0 0
      %1890 = vmatprep.subr.bf16.mxu0 0
      %1891 = vmatpush2.bf16.msra.mxu0 0
      %1892 = vmatprep.subr.bf16.mxu0 0
      %1893 = vmatpush2.bf16.msra.mxu0 0
      %1894 = vmatprep.subr.bf16.mxu0 0
      %1895 = vmatpush2.bf16.msra.mxu0 0
      %1896 = vmatprep.subr.bf16.mxu0 0
      %1897 = vmatpush2.bf16.msra.mxu0 0
      %1898 = vmatprep.subr.bf16.mxu0 0
      %1899 = vmatpush2.bf16.msra.mxu0 0
      %1900 = vmatprep.mubr.bf16.mxu0 0
      %1901 = vmatmul.mubr.bf16.gmra.mxu0 %v1823
      %v1902 = vpop.f32.mrf.mxu0
      %v1903 = vadd.f32 0.0, %v1902
      %v1904 = vpop.f32.mrf.mxu0
      %v1905 = vpop.f32.mrf.mxu0
      %v1906 = vadd.f32 0.0, %v1905
      %v1907 = vpop.f32.mrf.mxu0
      %1908 = vdwg.mxu0
      %v1909 = vadd.f32 %v1754, %v1860
      %v1910 = vadd.f32 %v1756, %v1862
      %v1911 = vadd.f32 %v1797, %v1903
      %v1912 = vadd.f32 %v1758, %v1864
      %v1913 = vadd.f32 %v1760, %v1866
      %v1914 = vadd.f32 %v1800, %v1906
      %s1915 = scalar_lea.vmem %s2, 24
      %v1916 = vld [vmem:[%s1915] sm:$0xf]
      %v1917 = vld [vmem:[%s1915 + $0x4] sm:$0xf]
      %v1920 = vunpack.c.l.b16 %v1916
      %v1921 = vunpack.c.l.b16 %v1917
      %v1922 = vpack.c.b16 %v1921, %v1920
      %1923 = vrot.lane.b32.xlu0 %v1606, 111
      %v1924 = vpop.permute.xlu0 %1923
      %1925 = vrot.lane.b32.xlu0 %v1607, 111
      %v1926 = vpop.permute.xlu0 %1925
      %1927 = vrot.lane.b32.xlu0 %v1608, 111
      %v1928 = vpop.permute.xlu0 %1927
      %v1929 = vsel %vm685, %v1924, %v1926
      %v1930 = vsel %vm685, %v1926, %v1928
      %v1935 = vsel %vm1620, %v1922, 0
      %1937 = vmatprep.subr.bf16.mxu0 0
      %1938 = vmatpush1.bf16.msra.mxu0 0
      %1939 = vmatprep.subr.bf16.mxu0 0
      %1940 = vmatpush1.bf16.msra.mxu0 0
      %1941 = vmatprep.subr.bf16.mxu0 0
      %1942 = vmatpush1.bf16.msra.mxu0 0
      %1943 = vmatprep.subr.bf16.mxu0 0
      %1944 = vmatpush1.bf16.msra.mxu0 0
      %1945 = vmatprep.subr.bf16.mxu0 0
      %1946 = vmatpush1.bf16.msra.mxu0 0
      %1947 = vmatprep.subr.bf16.mxu0 0
      %1948 = vmatpush1.bf16.msra.mxu0 0
      %1949 = vmatprep.subr.bf16.mxu0 0
      %1950 = vmatpush1.bf16.msra.mxu0 0
      %1951 = vmatprep.subr.bf16.mxu0 %v1930
      %1952 = vmatpush1.bf16.msra.mxu0 %v1929
      %1953 = vmatprep.subr.bf16.mxu0 0
      %1954 = vmatpush2.bf16.msra.mxu0 0
      %1955 = vmatprep.subr.bf16.mxu0 0
      %1956 = vmatpush2.bf16.msra.mxu0 0
      %1957 = vmatprep.subr.bf16.mxu0 0
      %1958 = vmatpush2.bf16.msra.mxu0 0
      %1959 = vmatprep.subr.bf16.mxu0 0
      %1960 = vmatpush2.bf16.msra.mxu0 0
      %1961 = vmatprep.subr.bf16.mxu0 0
      %1962 = vmatpush2.bf16.msra.mxu0 0
      %1963 = vmatprep.subr.bf16.mxu0 0
      %1964 = vmatpush2.bf16.msra.mxu0 0
      %1965 = vmatprep.subr.bf16.mxu0 0
      %1966 = vmatpush2.bf16.msra.mxu0 0
      %1967 = vmatprep.subr.bf16.mxu0 0
      %1968 = vmatpush2.bf16.msra.mxu0 0
      %1969 = vmatprep.mubr.bf16.mxu0 0
      %1970 = vmatmul.mubr.bf16.gmra.mxu0 %v1935
      %v1971 = vpop.f32.mrf.mxu0
      %v1972 = vadd.f32 0.0, %v1971
      %v1973 = vpop.f32.mrf.mxu0
      %v1974 = vadd.f32 0.0, %v1973
      %v1975 = vpop.f32.mrf.mxu0
      %v1976 = vadd.f32 0.0, %v1975
      %v1977 = vpop.f32.mrf.mxu0
      %v1978 = vadd.f32 0.0, %v1977
      %1979 = vdwg.mxu0
      %1980 = vmatprep.subr.bf16.mxu0 0
      %1981 = vmatpush1.bf16.msra.mxu0 0
      %1982 = vmatprep.subr.bf16.mxu0 0
      %1983 = vmatpush1.bf16.msra.mxu0 0
      %1984 = vmatprep.subr.bf16.mxu0 0
      %1985 = vmatpush1.bf16.msra.mxu0 0
      %1986 = vmatprep.subr.bf16.mxu0 0
      %1987 = vmatpush1.bf16.msra.mxu0 0
      %1988 = vmatprep.subr.bf16.mxu0 0
      %1989 = vmatpush1.bf16.msra.mxu0 0
      %1990 = vmatprep.subr.bf16.mxu0 0
      %1991 = vmatpush1.bf16.msra.mxu0 0
      %1992 = vmatprep.subr.bf16.mxu0 0
      %1993 = vmatpush1.bf16.msra.mxu0 0
      %1994 = vmatprep.subr.bf16.mxu0 0
      %1995 = vmatpush1.bf16.msra.mxu0 %v1928
      %1996 = vmatprep.subr.bf16.mxu0 0
      %1997 = vmatpush2.bf16.msra.mxu0 0
      %1998 = vmatprep.subr.bf16.mxu0 0
      %1999 = vmatpush2.bf16.msra.mxu0 0
      %2000 = vmatprep.subr.bf16.mxu0 0
      %2001 = vmatpush2.bf16.msra.mxu0 0
      %2002 = vmatprep.subr.bf16.mxu0 0
      %2003 = vmatpush2.bf16.msra.mxu0 0
      %2004 = vmatprep.subr.bf16.mxu0 0
      %2005 = vmatpush2.bf16.msra.mxu0 0
      %2006 = vmatprep.subr.bf16.mxu0 0
      %2007 = vmatpush2.bf16.msra.mxu0 0
      %2008 = vmatprep.subr.bf16.mxu0 0
      %2009 = vmatpush2.bf16.msra.mxu0 0
      %2010 = vmatprep.subr.bf16.mxu0 0
      %2011 = vmatpush2.bf16.msra.mxu0 0
      %2012 = vmatprep.mubr.bf16.mxu0 0
      %2013 = vmatmul.mubr.bf16.gmra.mxu0 %v1935
      %v2014 = vpop.f32.mrf.mxu0
      %v2015 = vadd.f32 0.0, %v2014
      %v2016 = vpop.f32.mrf.mxu0
      %v2017 = vpop.f32.mrf.mxu0
      %v2018 = vadd.f32 0.0, %v2017
      %v2019 = vpop.f32.mrf.mxu0
      %2020 = vdwg.mxu0
      %v2021 = vadd.f32 %v1909, %v1972
      %v2022 = vadd.f32 %v1910, %v1974
      %v2023 = vadd.f32 %v1911, %v2015
      %v2024 = vadd.f32 %v1912, %v1976
      %v2025 = vadd.f32 %v1913, %v1978
      %v2026 = vadd.f32 %v1914, %v2018
      %s2027 = scalar_lea.vmem %s2, 32
      %v2028 = vld [vmem:[%s2027] sm:$0xf]
      %v2029 = vld [vmem:[%s2027 + $0x4] sm:$0xf]
      %v2032 = vunpack.c.l.b16 %v2028
      %v2033 = vunpack.c.l.b16 %v2029
      %v2034 = vpack.c.b16 %v2033, %v2032
      %2035 = vrot.lane.b32.xlu0 %v1606, 110
      %v2036 = vpop.permute.xlu0 %2035
      %2037 = vrot.lane.b32.xlu0 %v1607, 110
      %v2038 = vpop.permute.xlu0 %2037
      %2039 = vrot.lane.b32.xlu0 %v1608, 110
      %v2040 = vpop.permute.xlu0 %2039
      %v2041 = vsel %vm822, %v2036, %v2038
      %v2042 = vsel %vm822, %v2038, %v2040
      %v2047 = vsel %vm1620, %v2034, 0
      %2049 = vmatprep.subr.bf16.mxu0 0
      %2050 = vmatpush1.bf16.msra.mxu0 0
      %2051 = vmatprep.subr.bf16.mxu0 0
      %2052 = vmatpush1.bf16.msra.mxu0 0
      %2053 = vmatprep.subr.bf16.mxu0 0
      %2054 = vmatpush1.bf16.msra.mxu0 0
      %2055 = vmatprep.subr.bf16.mxu0 0
      %2056 = vmatpush1.bf16.msra.mxu0 0
      %2057 = vmatprep.subr.bf16.mxu0 0
      %2058 = vmatpush1.bf16.msra.mxu0 0
      %2059 = vmatprep.subr.bf16.mxu0 0
      %2060 = vmatpush1.bf16.msra.mxu0 0
      %2061 = vmatprep.subr.bf16.mxu0 0
      %2062 = vmatpush1.bf16.msra.mxu0 0
      %2063 = vmatprep.subr.bf16.mxu0 %v2042
      %2064 = vmatpush1.bf16.msra.mxu0 %v2041
      %2065 = vmatprep.subr.bf16.mxu0 0
      %2066 = vmatpush2.bf16.msra.mxu0 0
      %2067 = vmatprep.subr.bf16.mxu0 0
      %2068 = vmatpush2.bf16.msra.mxu0 0
      %2069 = vmatprep.subr.bf16.mxu0 0
      %2070 = vmatpush2.bf16.msra.mxu0 0
      %2071 = vmatprep.subr.bf16.mxu0 0
      %2072 = vmatpush2.bf16.msra.mxu0 0
      %2073 = vmatprep.subr.bf16.mxu0 0
      %2074 = vmatpush2.bf16.msra.mxu0 0
      %2075 = vmatprep.subr.bf16.mxu0 0
      %2076 = vmatpush2.bf16.msra.mxu0 0
      %2077 = vmatprep.subr.bf16.mxu0 0
      %2078 = vmatpush2.bf16.msra.mxu0 0
      %2079 = vmatprep.subr.bf16.mxu0 0
      %2080 = vmatpush2.bf16.msra.mxu0 0
      %2081 = vmatprep.mubr.bf16.mxu0 0
      %2082 = vmatmul.mubr.bf16.gmra.mxu0 %v2047
      %v2083 = vpop.f32.mrf.mxu0
      %v2084 = vadd.f32 0.0, %v2083
      %v2085 = vpop.f32.mrf.mxu0
      %v2086 = vadd.f32 0.0, %v2085
      %v2087 = vpop.f32.mrf.mxu0
      %v2088 = vadd.f32 0.0, %v2087
      %v2089 = vpop.f32.mrf.mxu0
      %v2090 = vadd.f32 0.0, %v2089
      %2091 = vdwg.mxu0
      %2092 = vmatprep.subr.bf16.mxu0 0
      %2093 = vmatpush1.bf16.msra.mxu0 0
      %2094 = vmatprep.subr.bf16.mxu0 0
      %2095 = vmatpush1.bf16.msra.mxu0 0
      %2096 = vmatprep.subr.bf16.mxu0 0
      %2097 = vmatpush1.bf16.msra.mxu0 0
      %2098 = vmatprep.subr.bf16.mxu0 0
      %2099 = vmatpush1.bf16.msra.mxu0 0
      %2100 = vmatprep.subr.bf16.mxu0 0
      %2101 = vmatpush1.bf16.msra.mxu0 0
      %2102 = vmatprep.subr.bf16.mxu0 0
      %2103 = vmatpush1.bf16.msra.mxu0 0
      %2104 = vmatprep.subr.bf16.mxu0 0
      %2105 = vmatpush1.bf16.msra.mxu0 0
      %2106 = vmatprep.subr.bf16.mxu0 0
      %2107 = vmatpush1.bf16.msra.mxu0 %v2040
      %2108 = vmatprep.subr.bf16.mxu0 0
      %2109 = vmatpush2.bf16.msra.mxu0 0
      %2110 = vmatprep.subr.bf16.mxu0 0
      %2111 = vmatpush2.bf16.msra.mxu0 0
      %2112 = vmatprep.subr.bf16.mxu0 0
      %2113 = vmatpush2.bf16.msra.mxu0 0
      %2114 = vmatprep.subr.bf16.mxu0 0
      %2115 = vmatpush2.bf16.msra.mxu0 0
      %2116 = vmatprep.subr.bf16.mxu0 0
      %2117 = vmatpush2.bf16.msra.mxu0 0
      %2118 = vmatprep.subr.bf16.mxu0 0
      %2119 = vmatpush2.bf16.msra.mxu0 0
      %2120 = vmatprep.subr.bf16.mxu0 0
      %2121 = vmatpush2.bf16.msra.mxu0 0
      %2122 = vmatprep.subr.bf16.mxu0 0
      %2123 = vmatpush2.bf16.msra.mxu0 0
      %2124 = vmatprep.mubr.bf16.mxu0 0
      %2125 = vmatmul.mubr.bf16.gmra.mxu0 %v2047
      %v2126 = vpop.f32.mrf.mxu0
      %v2127 = vadd.f32 0.0, %v2126
      %v2128 = vpop.f32.mrf.mxu0
      %v2129 = vpop.f32.mrf.mxu0
      %v2130 = vadd.f32 0.0, %v2129
      %v2131 = vpop.f32.mrf.mxu0
      %2132 = vdwg.mxu0
      %v2133 = vadd.f32 %v2021, %v2084
      %v2134 = vadd.f32 %v2022, %v2086
      %v2135 = vadd.f32 %v2023, %v2127
      %v2136 = vadd.f32 %v2024, %v2088
      %v2137 = vadd.f32 %v2025, %v2090
      %v2138 = vadd.f32 %v2026, %v2130
      %s2139 = scalar_lea.vmem %s2, 40
      %v2140 = vld [vmem:[%s2139] sm:$0xf]
      %v2141 = vld [vmem:[%s2139 + $0x4] sm:$0xf]
      %v2144 = vunpack.c.l.b16 %v2140
      %v2145 = vunpack.c.l.b16 %v2141
      %v2146 = vpack.c.b16 %v2145, %v2144
      %2147 = vrot.lane.b32.xlu0 %v1606, 109
      %v2148 = vpop.permute.xlu0 %2147
      %2149 = vrot.lane.b32.xlu0 %v1607, 109
      %v2150 = vpop.permute.xlu0 %2149
      %2151 = vrot.lane.b32.xlu0 %v1608, 109
      %v2152 = vpop.permute.xlu0 %2151
      %v2153 = vsel %vm959, %v2148, %v2150
      %v2154 = vsel %vm959, %v2150, %v2152
      %v2159 = vsel %vm1620, %v2146, 0
      %2161 = vmatprep.subr.bf16.mxu0 0
      %2162 = vmatpush1.bf16.msra.mxu0 0
      %2163 = vmatprep.subr.bf16.mxu0 0
      %2164 = vmatpush1.bf16.msra.mxu0 0
      %2165 = vmatprep.subr.bf16.mxu0 0
      %2166 = vmatpush1.bf16.msra.mxu0 0
      %2167 = vmatprep.subr.bf16.mxu0 0
      %2168 = vmatpush1.bf16.msra.mxu0 0
      %2169 = vmatprep.subr.bf16.mxu0 0
      %2170 = vmatpush1.bf16.msra.mxu0 0
      %2171 = vmatprep.subr.bf16.mxu0 0
      %2172 = vmatpush1.bf16.msra.mxu0 0
      %2173 = vmatprep.subr.bf16.mxu0 0
      %2174 = vmatpush1.bf16.msra.mxu0 0
      %2175 = vmatprep.subr.bf16.mxu0 %v2154
      %2176 = vmatpush1.bf16.msra.mxu0 %v2153
      %2177 = vmatprep.subr.bf16.mxu0 0
      %2178 = vmatpush2.bf16.msra.mxu0 0
      %2179 = vmatprep.subr.bf16.mxu0 0
      %2180 = vmatpush2.bf16.msra.mxu0 0
      %2181 = vmatprep.subr.bf16.mxu0 0
      %2182 = vmatpush2.bf16.msra.mxu0 0
      %2183 = vmatprep.subr.bf16.mxu0 0
      %2184 = vmatpush2.bf16.msra.mxu0 0
      %2185 = vmatprep.subr.bf16.mxu0 0
      %2186 = vmatpush2.bf16.msra.mxu0 0
      %2187 = vmatprep.subr.bf16.mxu0 0
      %2188 = vmatpush2.bf16.msra.mxu0 0
      %2189 = vmatprep.subr.bf16.mxu0 0
      %2190 = vmatpush2.bf16.msra.mxu0 0
      %2191 = vmatprep.subr.bf16.mxu0 0
      %2192 = vmatpush2.bf16.msra.mxu0 0
      %2193 = vmatprep.mubr.bf16.mxu0 0
      %2194 = vmatmul.mubr.bf16.gmra.mxu0 %v2159
      %v2195 = vpop.f32.mrf.mxu0
      %v2196 = vadd.f32 0.0, %v2195
      %v2197 = vpop.f32.mrf.mxu0
      %v2198 = vadd.f32 0.0, %v2197
      %v2199 = vpop.f32.mrf.mxu0
      %v2200 = vadd.f32 0.0, %v2199
      %v2201 = vpop.f32.mrf.mxu0
      %v2202 = vadd.f32 0.0, %v2201
      %2203 = vdwg.mxu0
      %2204 = vmatprep.subr.bf16.mxu0 0
      %2205 = vmatpush1.bf16.msra.mxu0 0
      %2206 = vmatprep.subr.bf16.mxu0 0
      %2207 = vmatpush1.bf16.msra.mxu0 0
      %2208 = vmatprep.subr.bf16.mxu0 0
      %2209 = vmatpush1.bf16.msra.mxu0 0
      %2210 = vmatprep.subr.bf16.mxu0 0
      %2211 = vmatpush1.bf16.msra.mxu0 0
      %2212 = vmatprep.subr.bf16.mxu0 0
      %2213 = vmatpush1.bf16.msra.mxu0 0
      %2214 = vmatprep.subr.bf16.mxu0 0
      %2215 = vmatpush1.bf16.msra.mxu0 0
      %2216 = vmatprep.subr.bf16.mxu0 0
      %2217 = vmatpush1.bf16.msra.mxu0 0
      %2218 = vmatprep.subr.bf16.mxu0 0
      %2219 = vmatpush1.bf16.msra.mxu0 %v2152
      %2220 = vmatprep.subr.bf16.mxu0 0
      %2221 = vmatpush2.bf16.msra.mxu0 0
      %2222 = vmatprep.subr.bf16.mxu0 0
      %2223 = vmatpush2.bf16.msra.mxu0 0
      %2224 = vmatprep.subr.bf16.mxu0 0
      %2225 = vmatpush2.bf16.msra.mxu0 0
      %2226 = vmatprep.subr.bf16.mxu0 0
      %2227 = vmatpush2.bf16.msra.mxu0 0
      %2228 = vmatprep.subr.bf16.mxu0 0
      %2229 = vmatpush2.bf16.msra.mxu0 0
      %2230 = vmatprep.subr.bf16.mxu0 0
      %2231 = vmatpush2.bf16.msra.mxu0 0
      %2232 = vmatprep.subr.bf16.mxu0 0
      %2233 = vmatpush2.bf16.msra.mxu0 0
      %2234 = vmatprep.subr.bf16.mxu0 0
      %2235 = vmatpush2.bf16.msra.mxu0 0
      %2236 = vmatprep.mubr.bf16.mxu0 0
      %2237 = vmatmul.mubr.bf16.gmra.mxu0 %v2159
      %v2238 = vpop.f32.mrf.mxu0
      %v2239 = vadd.f32 0.0, %v2238
      %v2240 = vpop.f32.mrf.mxu0
      %v2241 = vpop.f32.mrf.mxu0
      %v2242 = vadd.f32 0.0, %v2241
      %v2243 = vpop.f32.mrf.mxu0
      %2244 = vdwg.mxu0
      %v2245 = vadd.f32 %v2133, %v2196
      %v2246 = vadd.f32 %v2134, %v2198
      %v2247 = vadd.f32 %v2135, %v2239
      %v2248 = vadd.f32 %v2136, %v2200
      %v2249 = vadd.f32 %v2137, %v2202
      %v2250 = vadd.f32 %v2138, %v2242
      %s2251 = scalar_lea.vmem %s2, 48
      %v2252 = vld [vmem:[%s2251] sm:$0xf]
      %v2253 = vld [vmem:[%s2251 + $0x4] sm:$0xf]
      %v2256 = vunpack.c.l.b16 %v2252
      %v2257 = vunpack.c.l.b16 %v2253
      %v2258 = vpack.c.b16 %v2257, %v2256
      %2259 = vrot.lane.b32.xlu0 %v1606, 94
      %v2260 = vpop.permute.xlu0 %2259
      %2261 = vrot.lane.b32.xlu0 %v1607, 94
      %v2262 = vpop.permute.xlu0 %2261
      %2263 = vrot.lane.b32.xlu0 %v1608, 94
      %v2264 = vpop.permute.xlu0 %2263
      %v2265 = vsel %vm1096, %v2260, %v2262
      %v2266 = vsel %vm1096, %v2262, %v2264
      %v2271 = vsel %vm1620, %v2258, 0
      %2273 = vmatprep.subr.bf16.mxu0 0
      %2274 = vmatpush1.bf16.msra.mxu0 0
      %2275 = vmatprep.subr.bf16.mxu0 0
      %2276 = vmatpush1.bf16.msra.mxu0 0
      %2277 = vmatprep.subr.bf16.mxu0 0
      %2278 = vmatpush1.bf16.msra.mxu0 0
      %2279 = vmatprep.subr.bf16.mxu0 0
      %2280 = vmatpush1.bf16.msra.mxu0 0
      %2281 = vmatprep.subr.bf16.mxu0 0
      %2282 = vmatpush1.bf16.msra.mxu0 0
      %2283 = vmatprep.subr.bf16.mxu0 0
      %2284 = vmatpush1.bf16.msra.mxu0 0
      %2285 = vmatprep.subr.bf16.mxu0 0
      %2286 = vmatpush1.bf16.msra.mxu0 0
      %2287 = vmatprep.subr.bf16.mxu0 %v2266
      %2288 = vmatpush1.bf16.msra.mxu0 %v2265
      %2289 = vmatprep.subr.bf16.mxu0 0
      %2290 = vmatpush2.bf16.msra.mxu0 0
      %2291 = vmatprep.subr.bf16.mxu0 0
      %2292 = vmatpush2.bf16.msra.mxu0 0
      %2293 = vmatprep.subr.bf16.mxu0 0
      %2294 = vmatpush2.bf16.msra.mxu0 0
      %2295 = vmatprep.subr.bf16.mxu0 0
      %2296 = vmatpush2.bf16.msra.mxu0 0
      %2297 = vmatprep.subr.bf16.mxu0 0
      %2298 = vmatpush2.bf16.msra.mxu0 0
      %2299 = vmatprep.subr.bf16.mxu0 0
      %2300 = vmatpush2.bf16.msra.mxu0 0
      %2301 = vmatprep.subr.bf16.mxu0 0
      %2302 = vmatpush2.bf16.msra.mxu0 0
      %2303 = vmatprep.subr.bf16.mxu0 0
      %2304 = vmatpush2.bf16.msra.mxu0 0
      %2305 = vmatprep.mubr.bf16.mxu0 0
      %2306 = vmatmul.mubr.bf16.gmra.mxu0 %v2271
      %v2307 = vpop.f32.mrf.mxu0
      %v2308 = vadd.f32 0.0, %v2307
      %v2309 = vpop.f32.mrf.mxu0
      %v2310 = vadd.f32 0.0, %v2309
      %v2311 = vpop.f32.mrf.mxu0
      %v2312 = vadd.f32 0.0, %v2311
      %v2313 = vpop.f32.mrf.mxu0
      %v2314 = vadd.f32 0.0, %v2313
      %2315 = vdwg.mxu0
      %2316 = vmatprep.subr.bf16.mxu0 0
      %2317 = vmatpush1.bf16.msra.mxu0 0
      %2318 = vmatprep.subr.bf16.mxu0 0
      %2319 = vmatpush1.bf16.msra.mxu0 0
      %2320 = vmatprep.subr.bf16.mxu0 0
      %2321 = vmatpush1.bf16.msra.mxu0 0
      %2322 = vmatprep.subr.bf16.mxu0 0
      %2323 = vmatpush1.bf16.msra.mxu0 0
      %2324 = vmatprep.subr.bf16.mxu0 0
      %2325 = vmatpush1.bf16.msra.mxu0 0
      %2326 = vmatprep.subr.bf16.mxu0 0
      %2327 = vmatpush1.bf16.msra.mxu0 0
      %2328 = vmatprep.subr.bf16.mxu0 0
      %2329 = vmatpush1.bf16.msra.mxu0 0
      %2330 = vmatprep.subr.bf16.mxu0 0
      %2331 = vmatpush1.bf16.msra.mxu0 %v2264
      %2332 = vmatprep.subr.bf16.mxu0 0
      %2333 = vmatpush2.bf16.msra.mxu0 0
      %2334 = vmatprep.subr.bf16.mxu0 0
      %2335 = vmatpush2.bf16.msra.mxu0 0
      %2336 = vmatprep.subr.bf16.mxu0 0
      %2337 = vmatpush2.bf16.msra.mxu0 0
      %2338 = vmatprep.subr.bf16.mxu0 0
      %2339 = vmatpush2.bf16.msra.mxu0 0
      %2340 = vmatprep.subr.bf16.mxu0 0
      %2341 = vmatpush2.bf16.msra.mxu0 0
      %2342 = vmatprep.subr.bf16.mxu0 0
      %2343 = vmatpush2.bf16.msra.mxu0 0
      %2344 = vmatprep.subr.bf16.mxu0 0
      %2345 = vmatpush2.bf16.msra.mxu0 0
      %2346 = vmatprep.subr.bf16.mxu0 0
      %2347 = vmatpush2.bf16.msra.mxu0 0
      %2348 = vmatprep.mubr.bf16.mxu0 0
      %2349 = vmatmul.mubr.bf16.gmra.mxu0 %v2271
      %v2350 = vpop.f32.mrf.mxu0
      %v2351 = vadd.f32 0.0, %v2350
      %v2352 = vpop.f32.mrf.mxu0
      %v2353 = vpop.f32.mrf.mxu0
      %v2354 = vadd.f32 0.0, %v2353
      %v2355 = vpop.f32.mrf.mxu0
      %2356 = vdwg.mxu0
      %v2357 = vadd.f32 %v2245, %v2308
      %v2358 = vadd.f32 %v2246, %v2310
      %v2359 = vadd.f32 %v2247, %v2351
      %v2360 = vadd.f32 %v2248, %v2312
      %v2361 = vadd.f32 %v2249, %v2314
      %v2362 = vadd.f32 %v2250, %v2354
      %s2363 = scalar_lea.vmem %s2, 56
      %v2364 = vld [vmem:[%s2363] sm:$0xf]
      %v2365 = vld [vmem:[%s2363 + $0x4] sm:$0xf]
      %v2368 = vunpack.c.l.b16 %v2364
      %v2369 = vunpack.c.l.b16 %v2365
      %v2370 = vpack.c.b16 %v2369, %v2368
      %2371 = vrot.lane.b32.xlu0 %v1606, 93
      %v2372 = vpop.permute.xlu0 %2371
      %2373 = vrot.lane.b32.xlu0 %v1607, 93
      %v2374 = vpop.permute.xlu0 %2373
      %2375 = vrot.lane.b32.xlu0 %v1608, 93
      %v2376 = vpop.permute.xlu0 %2375
      %v2377 = vsel %vm1233, %v2372, %v2374
      %v2378 = vsel %vm1233, %v2374, %v2376
      %v2383 = vsel %vm1620, %v2370, 0
      %2385 = vmatprep.subr.bf16.mxu0 0
      %2386 = vmatpush1.bf16.msra.mxu0 0
      %2387 = vmatprep.subr.bf16.mxu0 0
      %2388 = vmatpush1.bf16.msra.mxu0 0
      %2389 = vmatprep.subr.bf16.mxu0 0
      %2390 = vmatpush1.bf16.msra.mxu0 0
      %2391 = vmatprep.subr.bf16.mxu0 0
      %2392 = vmatpush1.bf16.msra.mxu0 0
      %2393 = vmatprep.subr.bf16.mxu0 0
      %2394 = vmatpush1.bf16.msra.mxu0 0
      %2395 = vmatprep.subr.bf16.mxu0 0
      %2396 = vmatpush1.bf16.msra.mxu0 0
      %2397 = vmatprep.subr.bf16.mxu0 0
      %2398 = vmatpush1.bf16.msra.mxu0 0
      %2399 = vmatprep.subr.bf16.mxu0 %v2378
      %2400 = vmatpush1.bf16.msra.mxu0 %v2377
      %2401 = vmatprep.subr.bf16.mxu0 0
      %2402 = vmatpush2.bf16.msra.mxu0 0
      %2403 = vmatprep.subr.bf16.mxu0 0
      %2404 = vmatpush2.bf16.msra.mxu0 0
      %2405 = vmatprep.subr.bf16.mxu0 0
      %2406 = vmatpush2.bf16.msra.mxu0 0
      %2407 = vmatprep.subr.bf16.mxu0 0
      %2408 = vmatpush2.bf16.msra.mxu0 0
      %2409 = vmatprep.subr.bf16.mxu0 0
      %2410 = vmatpush2.bf16.msra.mxu0 0
      %2411 = vmatprep.subr.bf16.mxu0 0
      %2412 = vmatpush2.bf16.msra.mxu0 0
      %2413 = vmatprep.subr.bf16.mxu0 0
      %2414 = vmatpush2.bf16.msra.mxu0 0
      %2415 = vmatprep.subr.bf16.mxu0 0
      %2416 = vmatpush2.bf16.msra.mxu0 0
      %2417 = vmatprep.mubr.bf16.mxu0 0
      %2418 = vmatmul.mubr.bf16.gmra.mxu0 %v2383
      %v2419 = vpop.f32.mrf.mxu0
      %v2420 = vadd.f32 0.0, %v2419
      %v2421 = vpop.f32.mrf.mxu0
      %v2422 = vadd.f32 0.0, %v2421
      %v2423 = vpop.f32.mrf.mxu0
      %v2424 = vadd.f32 0.0, %v2423
      %v2425 = vpop.f32.mrf.mxu0
      %v2426 = vadd.f32 0.0, %v2425
      %2427 = vdwg.mxu0
      %2428 = vmatprep.subr.bf16.mxu0 0
      %2429 = vmatpush1.bf16.msra.mxu0 0
      %2430 = vmatprep.subr.bf16.mxu0 0
      %2431 = vmatpush1.bf16.msra.mxu0 0
      %2432 = vmatprep.subr.bf16.mxu0 0
      %2433 = vmatpush1.bf16.msra.mxu0 0
      %2434 = vmatprep.subr.bf16.mxu0 0
      %2435 = vmatpush1.bf16.msra.mxu0 0
      %2436 = vmatprep.subr.bf16.mxu0 0
      %2437 = vmatpush1.bf16.msra.mxu0 0
      %2438 = vmatprep.subr.bf16.mxu0 0
      %2439 = vmatpush1.bf16.msra.mxu0 0
      %2440 = vmatprep.subr.bf16.mxu0 0
      %2441 = vmatpush1.bf16.msra.mxu0 0
      %2442 = vmatprep.subr.bf16.mxu0 0
      %2443 = vmatpush1.bf16.msra.mxu0 %v2376
      %2444 = vmatprep.subr.bf16.mxu0 0
      %2445 = vmatpush2.bf16.msra.mxu0 0
      %2446 = vmatprep.subr.bf16.mxu0 0
      %2447 = vmatpush2.bf16.msra.mxu0 0
      %2448 = vmatprep.subr.bf16.mxu0 0
      %2449 = vmatpush2.bf16.msra.mxu0 0
      %2450 = vmatprep.subr.bf16.mxu0 0
      %2451 = vmatpush2.bf16.msra.mxu0 0
      %2452 = vmatprep.subr.bf16.mxu0 0
      %2453 = vmatpush2.bf16.msra.mxu0 0
      %2454 = vmatprep.subr.bf16.mxu0 0
      %2455 = vmatpush2.bf16.msra.mxu0 0
      %2456 = vmatprep.subr.bf16.mxu0 0
      %2457 = vmatpush2.bf16.msra.mxu0 0
      %2458 = vmatprep.subr.bf16.mxu0 0
      %2459 = vmatpush2.bf16.msra.mxu0 0
      %2460 = vmatprep.mubr.bf16.mxu0 0
      %2461 = vmatmul.mubr.bf16.gmra.mxu0 %v2383
      %v2462 = vpop.f32.mrf.mxu0
      %v2463 = vadd.f32 0.0, %v2462
      %v2464 = vpop.f32.mrf.mxu0
      %v2465 = vpop.f32.mrf.mxu0
      %v2466 = vadd.f32 0.0, %v2465
      %v2467 = vpop.f32.mrf.mxu0
      %2468 = vdwg.mxu0
      %v2469 = vadd.f32 %v2357, %v2420
      %v2470 = vadd.f32 %v2358, %v2422
      %v2471 = vadd.f32 %v2359, %v2463
      %v2472 = vadd.f32 %v2360, %v2424
      %v2473 = vadd.f32 %v2361, %v2426
      %v2474 = vadd.f32 %v2362, %v2466
      %s2475 = scalar_lea.vmem %s2, 64
      %v2476 = vld [vmem:[%s2475] sm:$0xf]
      %v2477 = vld [vmem:[%s2475 + $0x4] sm:$0xf]
      %v2480 = vunpack.c.l.b16 %v2476
      %v2481 = vunpack.c.l.b16 %v2477
      %v2482 = vpack.c.b16 %v2481, %v2480
      %2483 = vrot.lane.b32.xlu0 %v1606, 92
      %v2484 = vpop.permute.xlu0 %2483
      %2485 = vrot.lane.b32.xlu0 %v1607, 92
      %v2486 = vpop.permute.xlu0 %2485
      %2487 = vrot.lane.b32.xlu0 %v1608, 92
      %v2488 = vpop.permute.xlu0 %2487
      %v2489 = vsel %vm1370, %v2484, %v2486
      %v2490 = vsel %vm1370, %v2486, %v2488
      %v2495 = vsel %vm1620, %v2482, 0
      %2497 = vmatprep.subr.bf16.mxu0 0
      %2498 = vmatpush1.bf16.msra.mxu0 0
      %2499 = vmatprep.subr.bf16.mxu0 0
      %2500 = vmatpush1.bf16.msra.mxu0 0
      %2501 = vmatprep.subr.bf16.mxu0 0
      %2502 = vmatpush1.bf16.msra.mxu0 0
      %2503 = vmatprep.subr.bf16.mxu0 0
      %2504 = vmatpush1.bf16.msra.mxu0 0
      %2505 = vmatprep.subr.bf16.mxu0 0
      %2506 = vmatpush1.bf16.msra.mxu0 0
      %2507 = vmatprep.subr.bf16.mxu0 0
      %2508 = vmatpush1.bf16.msra.mxu0 0
      %2509 = vmatprep.subr.bf16.mxu0 0
      %2510 = vmatpush1.bf16.msra.mxu0 0
      %2511 = vmatprep.subr.bf16.mxu0 %v2490
      %2512 = vmatpush1.bf16.msra.mxu0 %v2489
      %2513 = vmatprep.subr.bf16.mxu0 0
      %2514 = vmatpush2.bf16.msra.mxu0 0
      %2515 = vmatprep.subr.bf16.mxu0 0
      %2516 = vmatpush2.bf16.msra.mxu0 0
      %2517 = vmatprep.subr.bf16.mxu0 0
      %2518 = vmatpush2.bf16.msra.mxu0 0
      %2519 = vmatprep.subr.bf16.mxu0 0
      %2520 = vmatpush2.bf16.msra.mxu0 0
      %2521 = vmatprep.subr.bf16.mxu0 0
      %2522 = vmatpush2.bf16.msra.mxu0 0
      %2523 = vmatprep.subr.bf16.mxu0 0
      %2524 = vmatpush2.bf16.msra.mxu0 0
      %2525 = vmatprep.subr.bf16.mxu0 0
      %2526 = vmatpush2.bf16.msra.mxu0 0
      %2527 = vmatprep.subr.bf16.mxu0 0
      %2528 = vmatpush2.bf16.msra.mxu0 0
      %2529 = vmatprep.mubr.bf16.mxu0 0
      %2530 = vmatmul.mubr.bf16.gmra.mxu0 %v2495
      %v2531 = vpop.f32.mrf.mxu0
      %v2532 = vadd.f32 0.0, %v2531
      %v2533 = vpop.f32.mrf.mxu0
      %v2534 = vadd.f32 0.0, %v2533
      %v2535 = vpop.f32.mrf.mxu0
      %v2536 = vadd.f32 0.0, %v2535
      %v2537 = vpop.f32.mrf.mxu0
      %v2538 = vadd.f32 0.0, %v2537
      %2539 = vdwg.mxu0
      %2540 = vmatprep.subr.bf16.mxu0 0
      %2541 = vmatpush1.bf16.msra.mxu0 0
      %2542 = vmatprep.subr.bf16.mxu0 0
      %2543 = vmatpush1.bf16.msra.mxu0 0
      %2544 = vmatprep.subr.bf16.mxu0 0
      %2545 = vmatpush1.bf16.msra.mxu0 0
      %2546 = vmatprep.subr.bf16.mxu0 0
      %2547 = vmatpush1.bf16.msra.mxu0 0
      %2548 = vmatprep.subr.bf16.mxu0 0
      %2549 = vmatpush1.bf16.msra.mxu0 0
      %2550 = vmatprep.subr.bf16.mxu0 0
      %2551 = vmatpush1.bf16.msra.mxu0 0
      %2552 = vmatprep.subr.bf16.mxu0 0
      %2553 = vmatpush1.bf16.msra.mxu0 0
      %2554 = vmatprep.subr.bf16.mxu0 0
      %2555 = vmatpush1.bf16.msra.mxu0 %v2488
      %2556 = vmatprep.subr.bf16.mxu0 0
      %2557 = vmatpush2.bf16.msra.mxu0 0
      %2558 = vmatprep.subr.bf16.mxu0 0
      %2559 = vmatpush2.bf16.msra.mxu0 0
      %2560 = vmatprep.subr.bf16.mxu0 0
      %2561 = vmatpush2.bf16.msra.mxu0 0
      %2562 = vmatprep.subr.bf16.mxu0 0
      %2563 = vmatpush2.bf16.msra.mxu0 0
      %2564 = vmatprep.subr.bf16.mxu0 0
      %2565 = vmatpush2.bf16.msra.mxu0 0
      %2566 = vmatprep.subr.bf16.mxu0 0
      %2567 = vmatpush2.bf16.msra.mxu0 0
      %2568 = vmatprep.subr.bf16.mxu0 0
      %2569 = vmatpush2.bf16.msra.mxu0 0
      %2570 = vmatprep.subr.bf16.mxu0 0
      %2571 = vmatpush2.bf16.msra.mxu0 0
      %2572 = vmatprep.mubr.bf16.mxu0 0
      %2573 = vmatmul.mubr.bf16.gmra.mxu0 %v2495
      %v2574 = vpop.f32.mrf.mxu0
      %v2575 = vadd.f32 0.0, %v2574
      %v2576 = vpop.f32.mrf.mxu0
      %v2577 = vpop.f32.mrf.mxu0
      %v2578 = vadd.f32 0.0, %v2577
      %v2579 = vpop.f32.mrf.mxu0
      %2580 = vdwg.mxu0
      %v2581 = vadd.f32 %v2469, %v2532
      %v2582 = vadd.f32 %v2470, %v2534
      %v2583 = vadd.f32 %v2471, %v2575
      %v2584 = vadd.f32 %v2472, %v2536
      %v2585 = vadd.f32 %v2473, %v2538
      %v2586 = vadd.f32 %v2474, %v2578
      %v2587 = vld [vmem:[%s4] sm:$0xff]
      %v2588 = vld [vmem:[%s4 + $0x8] sm:$0xff]
      %2590 = vset.pattern.permute.xlu0 0
      %2591 = vperm.xlu0 %2590, %v2587
      %v2592 = vpop.permute.xlu0 %2591
      %2595 = vset.pattern.permute.xlu0 0
      %2596 = vperm.xlu0 %2595, %v2588
      %v2597 = vpop.permute.xlu0 %2596
      %v2599 = vadd.f32 %v2581, %v2592
      %v2600 = vadd.f32 %v2582, %v2592
      %v2601 = vadd.f32 %v2583, %v2592
      %v2602 = vadd.f32 %v2584, %v2597
      %v2603 = vadd.f32 %v2585, %v2597
      %v2604 = vadd.f32 %v2586, %v2597
      %vm2605 = vcmp.ge.f32.partialorder %v2599, 0.0
      %vm2606 = vcmp.ge.f32.partialorder %v2600, 0.0
      %vm2607 = vcmp.ge.f32.partialorder %v2601, 0.0
      %vm2608 = vcmp.ge.f32.partialorder %v2602, 0.0
      %vm2609 = vcmp.ge.f32.partialorder %v2603, 0.0
      %vm2610 = vcmp.ge.f32.partialorder %v2604, 0.0
      %v2611 = vld [vmem:[%s5] sm:$0xff]
      %v2612 = vld [vmem:[%s5 + $0x8] sm:$0xff]
      %2614 = vset.pattern.permute.xlu0 0
      %2615 = vperm.xlu0 %2614, %v2611
      %v2616 = vpop.permute.xlu0 %2615
      %2619 = vset.pattern.permute.xlu0 0
      %2620 = vperm.xlu0 %2619, %v2612
      %v2621 = vpop.permute.xlu0 %2620
      %v2623 = vmul.f32 %v2616, %v2599
      %v2624 = vmul.f32 %v2616, %v2600
      %v2625 = vmul.f32 %v2616, %v2601
      %v2626 = vmul.f32 %v2621, %v2602
      %v2627 = vmul.f32 %v2621, %v2603
      %v2628 = vmul.f32 %v2621, %v2604
      %v2629 = vsel %vm2605, %v2599, %v2623
      %v2630 = vsel %vm2606, %v2600, %v2624
      %v2631 = vsel %vm2607, %v2601, %v2625
      %v2632 = vsel %vm2608, %v2602, %v2626
      %v2633 = vsel %vm2609, %v2603, %v2627
      %v2634 = vsel %vm2610, %v2604, %v2628
      %2635 = vst [vmem:[%s278] sm:$0xff] %v2629
      %2636 = vst [vmem:[%s278 + $0x8] sm:$0xff] %v2630
      %2637 = vst.msk [vmem:[%s278 + $0x10] sm:$0xff] %vm1620, %v2631
      %2638 = vst [vmem:[%s278 + $0x18] sm:$0xff] %v2632
      %2639 = vst [vmem:[%s278 + $0x20] sm:$0xff] %v2633
      %2640 = vst.msk [vmem:[%s278 + $0x28] sm:$0xff] %vm1620, %v2634
      %p2641 = scmp.lt.s32.totalorder %s18, 15
      %s2642 = scalar_select %p2641, %s18, 15
      %s2643 = smul.addr %s2642, 6
      %s2644 = smul.addr %s2643, 8
      %s2645 = scalar_lea.vmem %s7, %s2644
      // Predicated region
      $region49: #{mean_variance_forward.1} parent=47 // pred_check
        %p2646 = pneg %p188
      $region50: #{mean_variance_forward.1} parent=47 // pred_check_branch
        %2648 = sbr.rel (%p2646) target = $region52
      $region51: #{mean_variance_forward.1} parent=47 // pred_region
        _
      $region52: #{mean_variance_forward.1} parent=47 // pred_fallthru
        _
    $region48: #{mean_variance_forward.1} parent=5 // pred_fallthru
      _
    %p2649 = scmp.le.s32.totalorder 2, %s13
    // Predicated region
    $region53: #{mean_variance_forward.1} parent=5 // pred_check
      %p2650 = pneg %p2649
    $region54: #{mean_variance_forward.1} parent=5 // pred_check_branch
      %2652 = sbr.rel (%p2650) target = $region56
    $region55: #{mean_variance_forward.1} parent=5 // pred_region
      %s2653 = ssub.s32 %s13, 2
      // Predicated region
      $region57: #{mean_variance_forward.1} parent=55 // pred_check
        %p2654 = pneg %p194
      $region58: #{mean_variance_forward.1} parent=55 // pred_check_branch
        %2656 = sbr.rel (%p2654) target = $region60
      $region59: #{mean_variance_forward.1} parent=55 // pred_region
        %p2657 = scmp.lt.s32.totalorder %s19, 15
        %s2658 = scalar_select %p2657, %s19, 15
        %s2659 = smul.addr %s2658, 6
        %s2660 = smul.addr %s2659, 8
        %s2661 = scalar_lea.vmem %s7, %s2660
      $region60: #{mean_variance_forward.1} parent=55 // pred_fallthru
        _
    $region56: #{mean_variance_forward.1} parent=5 // pred_fallthru
      _
  $region6: #{mean_variance_forward.1} parent=0 // loop_footer
    %s17 = sadd.s32 1, %s13
  $region7: #{mean_variance_forward.1} parent=0 // loop_footer_branch
    %12 = sbr.rel target = $region3
  $region8: #{mean_variance_forward.1} parent=0 // loop_exit
    _

</llo_original>
